<compile_context>
chip_gen: v5e
topology: v5e:2x2
jax: 0.10.0
libtpu: 0.0.40
codegen_flags: <defaults>
</compile_context>

<pallas_src>
import math

import jax
import jax.numpy as jnp
from jax.experimental import pallas as pl
from jax.experimental.pallas import tpu as pltpu


# ----------------------------------------------------------------------------
# Pallas kernel: masked GRU over time + MLP head + sigmoid + elementwise BCE
# ----------------------------------------------------------------------------
def cmf_kernel(
    x_ref,       # (T, Bb, 2H) bf16  aggregator embeddings, time-major
    mask_ref,    # (T, Bb, H)  f32   pre-broadcast length mask (1.0 = valid step)
    y_ref,       # (Bb, C)     f32   multilabel targets in [0, 1]
    wi_r_ref, wi_z_ref, wi_n_ref,    # (2H, H) bf16  GRU input-to-hidden, per gate
    wh_r_ref, wh_z_ref, wh_n_ref,    # (H, H)  bf16  GRU hidden-to-hidden, per gate
    bi_r_ref, bi_z_ref, bi_n_ref,    # (1, H)  f32   [b_ir+b_hr | b_iz+b_hz | b_in]
    bhn_ref,                         # (1, H)  f32   b_hn (must stay inside r*(...))
    w1_ref, b1_ref,                  # (H, H) bf16, (1, H) f32   out_layer[0]
    w2_ref, b2_ref,                  # (H, C) bf16, (1, C) f32   out_layer[2]
    bce_ref,     # (Bb, C) f32   elementwise BCE (mean finalized in wrapper)
    pred_ref,    # (Bb, C) f32
    feat_ref,    # (Bb, H) f32
):
    T, Bb, IN = x_ref.shape
    H = wh_r_ref.shape[0]

    # --- hoisted input projection: one pass off the serial chain, kept in vregs ---
    x = x_ref[...].reshape(T * Bb, IN)                                 # bf16
    gi_r = (jnp.dot(x, wi_r_ref[...], preferred_element_type=jnp.float32)
            + bi_r_ref[...]).reshape(T, Bb, H)
    gi_z = (jnp.dot(x, wi_z_ref[...], preferred_element_type=jnp.float32)
            + bi_z_ref[...]).reshape(T, Bb, H)
    gi_n = (jnp.dot(x, wi_n_ref[...], preferred_element_type=jnp.float32)
            + bi_n_ref[...]).reshape(T, Bb, H)

    # length-mask compare hoisted out of the recurrence (one vector compare)
    keep = mask_ref[...] != 0.0                                        # (T, Bb, H) bool

    wh_r = wh_r_ref[...]
    wh_z = wh_z_ref[...]
    wh_n = wh_n_ref[...]
    bhn = bhn_ref[...]

    # --- serial GRU recurrence, fully unrolled (T small & static) so every gi/keep
    #     slice uses a static offset and the LLO scheduler overlaps EUP sigmoid/
    #     tanh with the next step's MXU push.
    # TODO(synk): if T grows large, switch to a rolled fori_loop over a VMEM-held
    # gi to bound vreg pressure (64 vregs).
    h = jnp.zeros((Bb, H), jnp.float32)
    for t in range(T):
        hb = h.astype(jnp.bfloat16)
        gh_r = jnp.dot(hb, wh_r, preferred_element_type=jnp.float32)
        gh_z = jnp.dot(hb, wh_z, preferred_element_type=jnp.float32)
        gh_n = jnp.dot(hb, wh_n, preferred_element_type=jnp.float32)
        r = jax.nn.sigmoid(gi_r[t] + gh_r)
        z = jax.nn.sigmoid(gi_z[t] + gh_z)
        n = jnp.tanh(gi_n[t] + r * (gh_n + bhn))
        h_new = (1.0 - z) * n + z * h
        # packed-sequence semantics: freeze h once t >= len_non_zero[b]
        h = jnp.where(keep[t], h_new, h)

    feat_ref[...] = h

    # --- out_layer: Linear -> ReLU -> Linear (bf16 MXU, f32 accumulation) ---
    hidden = jnp.maximum(
        jnp.dot(h.astype(jnp.bfloat16), w1_ref[...],
                preferred_element_type=jnp.float32) + b1_ref[...],
        0.0,
    )
    logits = (
        jnp.dot(hidden.astype(jnp.bfloat16), w2_ref[...],
                preferred_element_type=jnp.float32) + b2_ref[...]
    )

    # sigmoid + elementwise binary cross entropy (log clamped like torch, >= -100)
    pred = jax.nn.sigmoid(logits)
    pred_ref[...] = pred
    y = y_ref[...]
    log_p = jnp.maximum(jnp.log(jnp.maximum(pred, 1e-37)), -100.0)
    log_1mp = jnp.maximum(jnp.log(jnp.maximum(1.0 - pred, 1e-37)), -100.0)
    bce_ref[...] = -(y * log_p + (1.0 - y) * log_1mp)


# ----------------------------------------------------------------------------
# Wrapper
# ----------------------------------------------------------------------------
def _full_spec(arr):
    """Whole-array block replicated across the batch grid (weights / biases)."""
    nd = arr.ndim
    return pl.BlockSpec(arr.shape, lambda i, _n=nd: (0,) * _n)


def cmf_forward(x_tbe, mask_tbh, y, params, batch_block=None):
    """x_tbe: (T, B, 2H) bf16; mask_tbh: (T, B, H) f32; y: (B, C) f32."""
    T, B, IN = x_tbe.shape
    H = params["wh_r"].shape[0]
    C = params["w2"].shape[1]

    # Batch grid: one block at toy shapes; tile (multiple of 16 rows) at
    # production batch so v7x's two TensorCores both get work.
    if batch_block is None:
        batch_block = B if B <= 256 else 256
    assert B % batch_block == 0, "batch must be divisible by batch_block"
    Bb = batch_block
    G = B // Bb

    weight_keys = ("wi_r", "wi_z", "wi_n", "wh_r", "wh_z", "wh_n",
                   "bi_r", "bi_z", "bi_n", "bhn", "w1", "b1", "w2", "b2")
    weights = tuple(params[k] for k in weight_keys)

    in_specs = [
        pl.BlockSpec((T, Bb, IN), lambda i: (0, i, 0)),   # x (time-major)
        pl.BlockSpec((T, Bb, H), lambda i: (0, i, 0)),    # mask
        pl.BlockSpec((Bb, C), lambda i: (i, 0)),          # y
    ] + [_full_spec(w) for w in weights]

    out_specs = (
        pl.BlockSpec((Bb, C), lambda i: (i, 0)),          # elementwise BCE
        pl.BlockSpec((Bb, C), lambda i: (i, 0)),          # pred
        pl.BlockSpec((Bb, H), lambda i: (i, 0)),          # feat
    )
    out_shape = (
        jax.ShapeDtypeStruct((B, C), jnp.float32),
        jax.ShapeDtypeStruct((B, C), jnp.float32),
        jax.ShapeDtypeStruct((B, H), jnp.float32),
    )

    bce, pred, feat = pl.pallas_call(
        cmf_kernel,
        grid=(G,),
        out_shape=out_shape,
        in_specs=in_specs,
        out_specs=out_specs,
        compiler_params=pltpu.CompilerParams(dimension_semantics=("parallel",)),
    )(x_tbe, mask_tbh, y, *weights)

    # reduction='mean' over all B*C elements (finalized outside the kernel so the
    # batch grid stays embarrassingly parallel and no (1,1) masked vst is emitted)
    loss = jnp.mean(bce)
    return loss, pred, feat


# ----------------------------------------------------------------------------
# Deterministic parameter init (mirrors CMF.init_weights) + host-side fusion
# ----------------------------------------------------------------------------
def xavier_uniform(key, shape_out_in, gain):
    fan_out, fan_in = shape_out_in
    bound = gain * math.sqrt(6.0 / (fan_in + fan_out))
    return jax.random.uniform(key, shape_out_in, jnp.float32, -bound, bound)


def bias_uniform(key, n):
    stdv = 1.0 / math.sqrt(n)
    return jax.random.uniform(key, (n,), jnp.float32, -stdv, stdv)


def init_params(key, h_dim, num_class):
    H, C = h_dim, num_class
    gain = math.sqrt(2.0)  # calculate_gain('relu')
    ks = jax.random.split(key, 8)

    # torch layout: weight_ih_l0 (3H, 2H), weight_hh_l0 (3H, H), gate order [r; z; n]
    w_ih = xavier_uniform(ks[0], (3 * H, 2 * H), gain)
    w_hh = xavier_uniform(ks[1], (3 * H, H), gain)
    b_ih = bias_uniform(ks[2], 3 * H)
    b_hh = bias_uniform(ks[3], 3 * H)
    w1 = xavier_uniform(ks[4], (H, H), gain)   # torch Linear stores (out, in)
    b1 = bias_uniform(ks[5], H)
    w2 = xavier_uniform(ks[6], (C, H), gain)
    b2 = bias_uniform(ks[7], C)

    raw = dict(w_ih=w_ih, w_hh=w_hh, b_ih=b_ih, b_hh=b_hh,
               w1=w1, b1=b1, w2=w2, b2=b2)

    bf = jnp.bfloat16
    kernel_params = dict(
        # per-gate (in, out) bf16 MXU operands
        wi_r=w_ih[:H].T.astype(bf),
        wi_z=w_ih[H:2 * H].T.astype(bf),
        wi_n=w_ih[2 * H:].T.astype(bf),
        wh_r=w_hh[:H].T.astype(bf),
        wh_z=w_hh[H:2 * H].T.astype(bf),
        wh_n=w_hh[2 * H:].T.astype(bf),
        # r/z biases pre-summed (b_i*+b_h*); n keeps b_in and b_hn separate
        bi_r=(b_ih[:H] + b_hh[:H]).reshape(1, H),
        bi_z=(b_ih[H:2 * H] + b_hh[H:2 * H]).reshape(1, H),
        bi_n=b_ih[2 * H:].reshape(1, H),
        bhn=b_hh[2 * H:].reshape(1, H),
        # out_layer, stored (in, out)
        w1=w1.T.astype(bf), b1=b1.reshape(1, H),
        w2=w2.T.astype(bf), b2=b2.reshape(1, C),
    )
    return kernel_params, raw


# ----------------------------------------------------------------------------
# Pure-JAX f32 reference (torch-equivalent math) for a tolerance check of the
# bf16-MXU kernel.
# ----------------------------------------------------------------------------
def ref_forward(embed_seq, lens, y, raw):
    B, T, _ = embed_seq.shape
    H = raw["w_hh"].shape[1]
    w_ih, w_hh, b_ih, b_hh = raw["w_ih"], raw["w_hh"], raw["b_ih"], raw["b_hh"]
    h = jnp.zeros((B, H), jnp.float32)
    for t in range(T):
        x_t = embed_seq[:, t]
        gi = x_t @ w_ih.T + b_ih
        gh = h @ w_hh.T + b_hh
        r = jax.nn.sigmoid(gi[:, :H] + gh[:, :H])
        z = jax.nn.sigmoid(gi[:, H:2 * H] + gh[:, H:2 * H])
        n = jnp.tanh(gi[:, 2 * H:] + r * gh[:, 2 * H:])
        h_new = (1.0 - z) * n + z * h
        h = jnp.where((t < lens)[:, None], h_new, h)
    hidden = jnp.maximum(h @ raw["w1"].T + raw["b1"], 0.0)
    logits = hidden @ raw["w2"].T + raw["b2"]
    pred = jax.nn.sigmoid(logits)
    log_p = jnp.maximum(jnp.log(jnp.maximum(pred, 1e-37)), -100.0)
    log_1mp = jnp.maximum(jnp.log(jnp.maximum(1.0 - pred, 1e-37)), -100.0)
    loss = jnp.mean(-(y * log_p + (1.0 - y) * log_1mp))
    return loss, pred, h


# ----------------------------------------------------------------------------
if __name__ == "__main__":
    # Small shapes consistent with the module defaults
    B = 8          # batch (len(time_set))
    T = 5          # seq_len (default 5)
    H = 32         # h_dim
    C = 8          # num_class
    IN = 2 * H     # GRU input size = 2 * h_dim

    key = jax.random.PRNGKey(0)
    k_p, k_x, k_len, k_y = jax.random.split(key, 4)

    params, raw = init_params(k_p, H, C)

    # Synthetic aggregator output (batch-first in torch)
    embed_seq = jax.random.normal(k_x, (B, T, IN), jnp.float32)
    # len_non_zero in [1, T]
    lens = jax.random.randint(k_len, (B,), 1, T + 1)
    # multilabel targets (idx = arange(B), so y_true = y)
    y = jax.random.bernoulli(k_y, 0.3, (B, C)).astype(jnp.float32)

    # Kernel-layout inputs: time-major bf16 x, pre-broadcast f32 mask (T, B, H)
    x_tbe = jnp.transpose(embed_seq, (1, 0, 2)).astype(jnp.bfloat16)
    mask_tbh = jnp.broadcast_to(
        (jnp.arange(T)[:, None] < lens[None, :]).astype(jnp.float32)[:, :, None],
        (T, B, H),
    )

    loss, pred, feat = cmf_forward(x_tbe, mask_tbh, y, params)
    jax.block_until_ready((loss, pred, feat))

    # Validate against the f32 reference (kernel uses bf16 MXU operands)
    loss_r, pred_r, feat_r = ref_forward(embed_seq, lens, y, raw)
    assert pred.shape == (B, C) and feat.shape == (B, H)
    assert bool(jnp.isfinite(loss))
    assert float(jnp.max(jnp.abs(pred - pred_r))) < 5e-2
    assert float(jnp.max(jnp.abs(feat - feat_r))) < 5e-2
    assert abs(float(loss) - float(loss_r)) < 5e-2
    print("KERNEL_OK")
</pallas_src>

<mosaic_0001>
module attributes {stable_mosaic.version = 11 : i64} {
  func.func @cmf_kernel(%arg0: i32, %arg1: memref<5x8x64xbf16, #tpu.memory_space<vmem>>, %arg2: memref<5x8x32xf32, #tpu.memory_space<vmem>>, %arg3: memref<8x8xf32, #tpu.memory_space<vmem>>, %arg4: memref<64x32xbf16, #tpu.memory_space<vmem>>, %arg5: memref<64x32xbf16, #tpu.memory_space<vmem>>, %arg6: memref<64x32xbf16, #tpu.memory_space<vmem>>, %arg7: memref<32x32xbf16, #tpu.memory_space<vmem>>, %arg8: memref<32x32xbf16, #tpu.memory_space<vmem>>, %arg9: memref<32x32xbf16, #tpu.memory_space<vmem>>, %arg10: memref<1x32xf32, #tpu.memory_space<vmem>>, %arg11: memref<1x32xf32, #tpu.memory_space<vmem>>, %arg12: memref<1x32xf32, #tpu.memory_space<vmem>>, %arg13: memref<1x32xf32, #tpu.memory_space<vmem>>, %arg14: memref<32x32xbf16, #tpu.memory_space<vmem>>, %arg15: memref<1x32xf32, #tpu.memory_space<vmem>>, %arg16: memref<32x8xbf16, #tpu.memory_space<vmem>>, %arg17: memref<1x8xf32, #tpu.memory_space<vmem>>, %arg18: memref<8x8xf32, #tpu.memory_space<vmem>>, %arg19: memref<8x8xf32, #tpu.memory_space<vmem>>, %arg20: memref<8x32xf32, #tpu.memory_space<vmem>>) attributes {dimension_semantics = [#tpu.dimension_semantics<parallel>], iteration_bounds = array<i64: 1>, scalar_prefetch = 0 : i64, scratch_operands = 0 : i64, tpu.core_type = #tpu.core_type<tc>, window_params = [{transform_indices = @transform_0, window_bounds = array<i64: 5, 8, 64>}, {transform_indices = @transform_1, window_bounds = array<i64: 5, 8, 32>}, {transform_indices = @transform_2, window_bounds = array<i64: 8, 8>}, {pipeline_mode = #tpu.pipeline_mode<synchronous>, transform_indices = @transform_3, window_bounds = array<i64: 64, 32>}, {pipeline_mode = #tpu.pipeline_mode<synchronous>, transform_indices = @transform_4, window_bounds = array<i64: 64, 32>}, {pipeline_mode = #tpu.pipeline_mode<synchronous>, transform_indices = @transform_5, window_bounds = array<i64: 64, 32>}, {pipeline_mode = #tpu.pipeline_mode<synchronous>, transform_indices = @transform_6, window_bounds = array<i64: 32, 32>}, {pipeline_mode = #tpu.pipeline_mode<synchronous>, transform_indices = @transform_7, window_bounds = array<i64: 32, 32>}, {pipeline_mode = #tpu.pipeline_mode<synchronous>, transform_indices = @transform_8, window_bounds = array<i64: 32, 32>}, {pipeline_mode = #tpu.pipeline_mode<synchronous>, transform_indices = @transform_9, window_bounds = array<i64: 1, 32>}, {pipeline_mode = #tpu.pipeline_mode<synchronous>, transform_indices = @transform_10, window_bounds = array<i64: 1, 32>}, {pipeline_mode = #tpu.pipeline_mode<synchronous>, transform_indices = @transform_11, window_bounds = array<i64: 1, 32>}, {pipeline_mode = #tpu.pipeline_mode<synchronous>, transform_indices = @transform_12, window_bounds = array<i64: 1, 32>}, {pipeline_mode = #tpu.pipeline_mode<synchronous>, transform_indices = @transform_13, window_bounds = array<i64: 32, 32>}, {pipeline_mode = #tpu.pipeline_mode<synchronous>, transform_indices = @transform_14, window_bounds = array<i64: 1, 32>}, {pipeline_mode = #tpu.pipeline_mode<synchronous>, transform_indices = @transform_15, window_bounds = array<i64: 32, 8>}, {pipeline_mode = #tpu.pipeline_mode<synchronous>, transform_indices = @transform_16, window_bounds = array<i64: 1, 8>}, {transform_indices = @transform_17, window_bounds = array<i64: 8, 8>}, {transform_indices = @transform_18, window_bounds = array<i64: 8, 8>}, {transform_indices = @transform_19, window_bounds = array<i64: 8, 32>}]} {
    %c0 = arith.constant 0 : index
    %c0_0 = arith.constant 0 : index
    %c0_1 = arith.constant 0 : index
    %0 = vector.load %arg1[%c0, %c0_0, %c0_1] : memref<5x8x64xbf16, #tpu.memory_space<vmem>>, vector<5x8x64xbf16>
    %1 = vector.shape_cast %0 : vector<5x8x64xbf16> to vector<40x64xbf16>
    %c0_2 = arith.constant 0 : index
    %c0_3 = arith.constant 0 : index
    %2 = vector.load %arg4[%c0_2, %c0_3] : memref<64x32xbf16, #tpu.memory_space<vmem>>, vector<64x32xbf16>
    %cst = arith.constant dense<0.000000e+00> : vector<40x32xf32>
    %3 = tpu.matmul %1, %2, %cst {dimension_numbers = #tpu.dot_dimension_numbers<[1], [0], [0], [1], [0, 0, 1, 1], [], []>} : vector<40x64xbf16>, vector<64x32xbf16>, vector<40x32xf32> -> vector<40x32xf32>
    %c0_4 = arith.constant 0 : index
    %c0_5 = arith.constant 0 : index
    %4 = vector.load %arg10[%c0_4, %c0_5] : memref<1x32xf32, #tpu.memory_space<vmem>>, vector<1x32xf32>
    %5 = vector.broadcast %4 : vector<1x32xf32> to vector<40x32xf32>
    %6 = arith.addf %3, %5 : vector<40x32xf32>
    %7 = vector.shape_cast %6 : vector<40x32xf32> to vector<5x8x32xf32>
    %c0_6 = arith.constant 0 : index
    %c0_7 = arith.constant 0 : index
    %8 = vector.load %arg5[%c0_6, %c0_7] : memref<64x32xbf16, #tpu.memory_space<vmem>>, vector<64x32xbf16>
    %cst_8 = arith.constant dense<0.000000e+00> : vector<40x32xf32>
    %9 = tpu.matmul %1, %8, %cst_8 {dimension_numbers = #tpu.dot_dimension_numbers<[1], [0], [0], [1], [0, 0, 1, 1], [], []>} : vector<40x64xbf16>, vector<64x32xbf16>, vector<40x32xf32> -> vector<40x32xf32>
    %c0_9 = arith.constant 0 : index
    %c0_10 = arith.constant 0 : index
    %10 = vector.load %arg11[%c0_9, %c0_10] : memref<1x32xf32, #tpu.memory_space<vmem>>, vector<1x32xf32>
    %11 = vector.broadcast %10 : vector<1x32xf32> to vector<40x32xf32>
    %12 = arith.addf %9, %11 : vector<40x32xf32>
    %13 = vector.shape_cast %12 : vector<40x32xf32> to vector<5x8x32xf32>
    %c0_11 = arith.constant 0 : index
    %c0_12 = arith.constant 0 : index
    %14 = vector.load %arg6[%c0_11, %c0_12] : memref<64x32xbf16, #tpu.memory_space<vmem>>, vector<64x32xbf16>
    %cst_13 = arith.constant dense<0.000000e+00> : vector<40x32xf32>
    %15 = tpu.matmul %1, %14, %cst_13 {dimension_numbers = #tpu.dot_dimension_numbers<[1], [0], [0], [1], [0, 0, 1, 1], [], []>} : vector<40x64xbf16>, vector<64x32xbf16>, vector<40x32xf32> -> vector<40x32xf32>
    %c0_14 = arith.constant 0 : index
    %c0_15 = arith.constant 0 : index
    %16 = vector.load %arg12[%c0_14, %c0_15] : memref<1x32xf32, #tpu.memory_space<vmem>>, vector<1x32xf32>
    %17 = vector.broadcast %16 : vector<1x32xf32> to vector<40x32xf32>
    %18 = arith.addf %15, %17 : vector<40x32xf32>
    %19 = vector.shape_cast %18 : vector<40x32xf32> to vector<5x8x32xf32>
    %c0_16 = arith.constant 0 : index
    %c0_17 = arith.constant 0 : index
    %c0_18 = arith.constant 0 : index
    %20 = vector.load %arg2[%c0_16, %c0_17, %c0_18] : memref<5x8x32xf32, #tpu.memory_space<vmem>>, vector<5x8x32xf32>
    %cst_19 = arith.constant 0.000000e+00 : f32
    %21 = vector.broadcast %cst_19 : f32 to vector<5x8x32xf32>
    %22 = arith.cmpf one, %20, %21 : vector<5x8x32xf32>
    %c0_20 = arith.constant 0 : index
    %c0_21 = arith.constant 0 : index
    %23 = vector.load %arg7[%c0_20, %c0_21] : memref<32x32xbf16, #tpu.memory_space<vmem>>, vector<32x32xbf16>
    %c0_22 = arith.constant 0 : index
    %c0_23 = arith.constant 0 : index
    %24 = vector.load %arg8[%c0_22, %c0_23] : memref<32x32xbf16, #tpu.memory_space<vmem>>, vector<32x32xbf16>
    %c0_24 = arith.constant 0 : index
    %c0_25 = arith.constant 0 : index
    %25 = vector.load %arg9[%c0_24, %c0_25] : memref<32x32xbf16, #tpu.memory_space<vmem>>, vector<32x32xbf16>
    %c0_26 = arith.constant 0 : index
    %c0_27 = arith.constant 0 : index
    %26 = vector.load %arg13[%c0_26, %c0_27] : memref<1x32xf32, #tpu.memory_space<vmem>>, vector<1x32xf32>
    %cst_28 = arith.constant 0.000000e+00 : f32
    %27 = vector.broadcast %cst_28 : f32 to vector<8x32xf32>
    %28 = arith.truncf %27 : vector<8x32xf32> to vector<8x32xbf16>
    %cst_29 = arith.constant dense<0.000000e+00> : vector<8x32xf32>
    %29 = tpu.matmul %28, %23, %cst_29 {dimension_numbers = #tpu.dot_dimension_numbers<[1], [0], [0], [1], [0, 0, 1, 1], [], []>} : vector<8x32xbf16>, vector<32x32xbf16>, vector<8x32xf32> -> vector<8x32xf32>
    %cst_30 = arith.constant dense<0.000000e+00> : vector<8x32xf32>
    %30 = tpu.matmul %28, %24, %cst_30 {dimension_numbers = #tpu.dot_dimension_numbers<[1], [0], [0], [1], [0, 0, 1, 1], [], []>} : vector<8x32xbf16>, vector<32x32xbf16>, vector<8x32xf32> -> vector<8x32xf32>
    %cst_31 = arith.constant dense<0.000000e+00> : vector<8x32xf32>
    %31 = tpu.matmul %28, %25, %cst_31 {dimension_numbers = #tpu.dot_dimension_numbers<[1], [0], [0], [1], [0, 0, 1, 1], [], []>} : vector<8x32xbf16>, vector<32x32xbf16>, vector<8x32xf32> -> vector<8x32xf32>
    %32 = vector.extract_strided_slice %7 {offsets = [0, 0, 0], sizes = [1, 8, 32], strides = [1, 1, 1]} : vector<5x8x32xf32> to vector<1x8x32xf32>
    %33 = vector.shape_cast %32 : vector<1x8x32xf32> to vector<8x32xf32>
    %34 = arith.addf %33, %29 : vector<8x32xf32>
    %35 = arith.negf %34 : vector<8x32xf32>
    %36 = math.exp %35 : vector<8x32xf32>
    %cst_32 = arith.constant 1.000000e+00 : f32
    %37 = vector.broadcast %cst_32 : f32 to vector<8x32xf32>
    %38 = arith.addf %37, %36 : vector<8x32xf32>
    %39 = arith.divf %37, %38 : vector<8x32xf32>
    %40 = vector.extract_strided_slice %13 {offsets = [0, 0, 0], sizes = [1, 8, 32], strides = [1, 1, 1]} : vector<5x8x32xf32> to vector<1x8x32xf32>
    %41 = vector.shape_cast %40 : vector<1x8x32xf32> to vector<8x32xf32>
    %42 = arith.addf %41, %30 : vector<8x32xf32>
    %43 = arith.negf %42 : vector<8x32xf32>
    %44 = math.exp %43 : vector<8x32xf32>
    %cst_33 = arith.constant 1.000000e+00 : f32
    %45 = vector.broadcast %cst_33 : f32 to vector<8x32xf32>
    %46 = arith.addf %45, %44 : vector<8x32xf32>
    %47 = arith.divf %45, %46 : vector<8x32xf32>
    %48 = vector.extract_strided_slice %19 {offsets = [0, 0, 0], sizes = [1, 8, 32], strides = [1, 1, 1]} : vector<5x8x32xf32> to vector<1x8x32xf32>
    %49 = vector.shape_cast %48 : vector<1x8x32xf32> to vector<8x32xf32>
    %50 = vector.broadcast %26 : vector<1x32xf32> to vector<8x32xf32>
    %51 = arith.addf %31, %50 : vector<8x32xf32>
    %52 = arith.mulf %39, %51 : vector<8x32xf32>
    %53 = arith.addf %49, %52 : vector<8x32xf32>
    %54 = math.tanh %53 : vector<8x32xf32>
    %cst_34 = arith.constant 1.000000e+00 : f32
    %55 = vector.broadcast %cst_34 : f32 to vector<8x32xf32>
    %56 = arith.subf %55, %47 : vector<8x32xf32>
    %57 = arith.mulf %56, %54 : vector<8x32xf32>
    %58 = arith.mulf %47, %27 : vector<8x32xf32>
    %59 = arith.addf %57, %58 : vector<8x32xf32>
    %60 = vector.extract_strided_slice %22 {offsets = [0, 0, 0], sizes = [1, 8, 32], strides = [1, 1, 1]} : vector<5x8x32xi1> to vector<1x8x32xi1>
    %61 = vector.shape_cast %60 : vector<1x8x32xi1> to vector<8x32xi1>
    %62 = arith.select %61, %59, %27 : vector<8x32xi1>, vector<8x32xf32>
    %63 = arith.truncf %62 : vector<8x32xf32> to vector<8x32xbf16>
    %cst_35 = arith.constant dense<0.000000e+00> : vector<8x32xf32>
    %64 = tpu.matmul %63, %23, %cst_35 {dimension_numbers = #tpu.dot_dimension_numbers<[1], [0], [0], [1], [0, 0, 1, 1], [], []>} : vector<8x32xbf16>, vector<32x32xbf16>, vector<8x32xf32> -> vector<8x32xf32>
    %cst_36 = arith.constant dense<0.000000e+00> : vector<8x32xf32>
    %65 = tpu.matmul %63, %24, %cst_36 {dimension_numbers = #tpu.dot_dimension_numbers<[1], [0], [0], [1], [0, 0, 1, 1], [], []>} : vector<8x32xbf16>, vector<32x32xbf16>, vector<8x32xf32> -> vector<8x32xf32>
    %cst_37 = arith.constant dense<0.000000e+00> : vector<8x32xf32>
    %66 = tpu.matmul %63, %25, %cst_37 {dimension_numbers = #tpu.dot_dimension_numbers<[1], [0], [0], [1], [0, 0, 1, 1], [], []>} : vector<8x32xbf16>, vector<32x32xbf16>, vector<8x32xf32> -> vector<8x32xf32>
    %67 = vector.extract_strided_slice %7 {offsets = [1, 0, 0], sizes = [1, 8, 32], strides = [1, 1, 1]} : vector<5x8x32xf32> to vector<1x8x32xf32>
    %68 = vector.shape_cast %67 : vector<1x8x32xf32> to vector<8x32xf32>
    %69 = arith.addf %68, %64 : vector<8x32xf32>
    %70 = arith.negf %69 : vector<8x32xf32>
    %71 = math.exp %70 : vector<8x32xf32>
    %cst_38 = arith.constant 1.000000e+00 : f32
    %72 = vector.broadcast %cst_38 : f32 to vector<8x32xf32>
    %73 = arith.addf %72, %71 : vector<8x32xf32>
    %74 = arith.divf %72, %73 : vector<8x32xf32>
    %75 = vector.extract_strided_slice %13 {offsets = [1, 0, 0], sizes = [1, 8, 32], strides = [1, 1, 1]} : vector<5x8x32xf32> to vector<1x8x32xf32>
    %76 = vector.shape_cast %75 : vector<1x8x32xf32> to vector<8x32xf32>
    %77 = arith.addf %76, %65 : vector<8x32xf32>
    %78 = arith.negf %77 : vector<8x32xf32>
    %79 = math.exp %78 : vector<8x32xf32>
    %cst_39 = arith.constant 1.000000e+00 : f32
    %80 = vector.broadcast %cst_39 : f32 to vector<8x32xf32>
    %81 = arith.addf %80, %79 : vector<8x32xf32>
    %82 = arith.divf %80, %81 : vector<8x32xf32>
    %83 = vector.extract_strided_slice %19 {offsets = [1, 0, 0], sizes = [1, 8, 32], strides = [1, 1, 1]} : vector<5x8x32xf32> to vector<1x8x32xf32>
    %84 = vector.shape_cast %83 : vector<1x8x32xf32> to vector<8x32xf32>
    %85 = vector.broadcast %26 : vector<1x32xf32> to vector<8x32xf32>
    %86 = arith.addf %66, %85 : vector<8x32xf32>
    %87 = arith.mulf %74, %86 : vector<8x32xf32>
    %88 = arith.addf %84, %87 : vector<8x32xf32>
    %89 = math.tanh %88 : vector<8x32xf32>
    %cst_40 = arith.constant 1.000000e+00 : f32
    %90 = vector.broadcast %cst_40 : f32 to vector<8x32xf32>
    %91 = arith.subf %90, %82 : vector<8x32xf32>
    %92 = arith.mulf %91, %89 : vector<8x32xf32>
    %93 = arith.mulf %82, %62 : vector<8x32xf32>
    %94 = arith.addf %92, %93 : vector<8x32xf32>
    %95 = vector.extract_strided_slice %22 {offsets = [1, 0, 0], sizes = [1, 8, 32], strides = [1, 1, 1]} : vector<5x8x32xi1> to vector<1x8x32xi1>
    %96 = vector.shape_cast %95 : vector<1x8x32xi1> to vector<8x32xi1>
    %97 = arith.select %96, %94, %62 : vector<8x32xi1>, vector<8x32xf32>
    %98 = arith.truncf %97 : vector<8x32xf32> to vector<8x32xbf16>
    %cst_41 = arith.constant dense<0.000000e+00> : vector<8x32xf32>
    %99 = tpu.matmul %98, %23, %cst_41 {dimension_numbers = #tpu.dot_dimension_numbers<[1], [0], [0], [1], [0, 0, 1, 1], [], []>} : vector<8x32xbf16>, vector<32x32xbf16>, vector<8x32xf32> -> vector<8x32xf32>
    %cst_42 = arith.constant dense<0.000000e+00> : vector<8x32xf32>
    %100 = tpu.matmul %98, %24, %cst_42 {dimension_numbers = #tpu.dot_dimension_numbers<[1], [0], [0], [1], [0, 0, 1, 1], [], []>} : vector<8x32xbf16>, vector<32x32xbf16>, vector<8x32xf32> -> vector<8x32xf32>
    %cst_43 = arith.constant dense<0.000000e+00> : vector<8x32xf32>
    %101 = tpu.matmul %98, %25, %cst_43 {dimension_numbers = #tpu.dot_dimension_numbers<[1], [0], [0], [1], [0, 0, 1, 1], [], []>} : vector<8x32xbf16>, vector<32x32xbf16>, vector<8x32xf32> -> vector<8x32xf32>
    %102 = vector.extract_strided_slice %7 {offsets = [2, 0, 0], sizes = [1, 8, 32], strides = [1, 1, 1]} : vector<5x8x32xf32> to vector<1x8x32xf32>
    %103 = vector.shape_cast %102 : vector<1x8x32xf32> to vector<8x32xf32>
    %104 = arith.addf %103, %99 : vector<8x32xf32>
    %105 = arith.negf %104 : vector<8x32xf32>
    %106 = math.exp %105 : vector<8x32xf32>
    %cst_44 = arith.constant 1.000000e+00 : f32
    %107 = vector.broadcast %cst_44 : f32 to vector<8x32xf32>
    %108 = arith.addf %107, %106 : vector<8x32xf32>
    %109 = arith.divf %107, %108 : vector<8x32xf32>
    %110 = vector.extract_strided_slice %13 {offsets = [2, 0, 0], sizes = [1, 8, 32], strides = [1, 1, 1]} : vector<5x8x32xf32> to vector<1x8x32xf32>
    %111 = vector.shape_cast %110 : vector<1x8x32xf32> to vector<8x32xf32>
    %112 = arith.addf %111, %100 : vector<8x32xf32>
    %113 = arith.negf %112 : vector<8x32xf32>
    %114 = math.exp %113 : vector<8x32xf32>
    %cst_45 = arith.constant 1.000000e+00 : f32
    %115 = vector.broadcast %cst_45 : f32 to vector<8x32xf32>
    %116 = arith.addf %115, %114 : vector<8x32xf32>
    %117 = arith.divf %115, %116 : vector<8x32xf32>
    %118 = vector.extract_strided_slice %19 {offsets = [2, 0, 0], sizes = [1, 8, 32], strides = [1, 1, 1]} : vector<5x8x32xf32> to vector<1x8x32xf32>
    %119 = vector.shape_cast %118 : vector<1x8x32xf32> to vector<8x32xf32>
    %120 = vector.broadcast %26 : vector<1x32xf32> to vector<8x32xf32>
    %121 = arith.addf %101, %120 : vector<8x32xf32>
    %122 = arith.mulf %109, %121 : vector<8x32xf32>
    %123 = arith.addf %119, %122 : vector<8x32xf32>
    %124 = math.tanh %123 : vector<8x32xf32>
    %cst_46 = arith.constant 1.000000e+00 : f32
    %125 = vector.broadcast %cst_46 : f32 to vector<8x32xf32>
    %126 = arith.subf %125, %117 : vector<8x32xf32>
    %127 = arith.mulf %126, %124 : vector<8x32xf32>
    %128 = arith.mulf %117, %97 : vector<8x32xf32>
    %129 = arith.addf %127, %128 : vector<8x32xf32>
    %130 = vector.extract_strided_slice %22 {offsets = [2, 0, 0], sizes = [1, 8, 32], strides = [1, 1, 1]} : vector<5x8x32xi1> to vector<1x8x32xi1>
    %131 = vector.shape_cast %130 : vector<1x8x32xi1> to vector<8x32xi1>
    %132 = arith.select %131, %129, %97 : vector<8x32xi1>, vector<8x32xf32>
    %133 = arith.truncf %132 : vector<8x32xf32> to vector<8x32xbf16>
    %cst_47 = arith.constant dense<0.000000e+00> : vector<8x32xf32>
    %134 = tpu.matmul %133, %23, %cst_47 {dimension_numbers = #tpu.dot_dimension_numbers<[1], [0], [0], [1], [0, 0, 1, 1], [], []>} : vector<8x32xbf16>, vector<32x32xbf16>, vector<8x32xf32> -> vector<8x32xf32>
    %cst_48 = arith.constant dense<0.000000e+00> : vector<8x32xf32>
    %135 = tpu.matmul %133, %24, %cst_48 {dimension_numbers = #tpu.dot_dimension_numbers<[1], [0], [0], [1], [0, 0, 1, 1], [], []>} : vector<8x32xbf16>, vector<32x32xbf16>, vector<8x32xf32> -> vector<8x32xf32>
    %cst_49 = arith.constant dense<0.000000e+00> : vector<8x32xf32>
    %136 = tpu.matmul %133, %25, %cst_49 {dimension_numbers = #tpu.dot_dimension_numbers<[1], [0], [0], [1], [0, 0, 1, 1], [], []>} : vector<8x32xbf16>, vector<32x32xbf16>, vector<8x32xf32> -> vector<8x32xf32>
    %137 = vector.extract_strided_slice %7 {offsets = [3, 0, 0], sizes = [1, 8, 32], strides = [1, 1, 1]} : vector<5x8x32xf32> to vector<1x8x32xf32>
    %138 = vector.shape_cast %137 : vector<1x8x32xf32> to vector<8x32xf32>
    %139 = arith.addf %138, %134 : vector<8x32xf32>
    %140 = arith.negf %139 : vector<8x32xf32>
    %141 = math.exp %140 : vector<8x32xf32>
    %cst_50 = arith.constant 1.000000e+00 : f32
    %142 = vector.broadcast %cst_50 : f32 to vector<8x32xf32>
    %143 = arith.addf %142, %141 : vector<8x32xf32>
    %144 = arith.divf %142, %143 : vector<8x32xf32>
    %145 = vector.extract_strided_slice %13 {offsets = [3, 0, 0], sizes = [1, 8, 32], strides = [1, 1, 1]} : vector<5x8x32xf32> to vector<1x8x32xf32>
    %146 = vector.shape_cast %145 : vector<1x8x32xf32> to vector<8x32xf32>
    %147 = arith.addf %146, %135 : vector<8x32xf32>
    %148 = arith.negf %147 : vector<8x32xf32>
    %149 = math.exp %148 : vector<8x32xf32>
    %cst_51 = arith.constant 1.000000e+00 : f32
    %150 = vector.broadcast %cst_51 : f32 to vector<8x32xf32>
    %151 = arith.addf %150, %149 : vector<8x32xf32>
    %152 = arith.divf %150, %151 : vector<8x32xf32>
    %153 = vector.extract_strided_slice %19 {offsets = [3, 0, 0], sizes = [1, 8, 32], strides = [1, 1, 1]} : vector<5x8x32xf32> to vector<1x8x32xf32>
    %154 = vector.shape_cast %153 : vector<1x8x32xf32> to vector<8x32xf32>
    %155 = vector.broadcast %26 : vector<1x32xf32> to vector<8x32xf32>
    %156 = arith.addf %136, %155 : vector<8x32xf32>
    %157 = arith.mulf %144, %156 : vector<8x32xf32>
    %158 = arith.addf %154, %157 : vector<8x32xf32>
    %159 = math.tanh %158 : vector<8x32xf32>
    %cst_52 = arith.constant 1.000000e+00 : f32
    %160 = vector.broadcast %cst_52 : f32 to vector<8x32xf32>
    %161 = arith.subf %160, %152 : vector<8x32xf32>
    %162 = arith.mulf %161, %159 : vector<8x32xf32>
    %163 = arith.mulf %152, %132 : vector<8x32xf32>
    %164 = arith.addf %162, %163 : vector<8x32xf32>
    %165 = vector.extract_strided_slice %22 {offsets = [3, 0, 0], sizes = [1, 8, 32], strides = [1, 1, 1]} : vector<5x8x32xi1> to vector<1x8x32xi1>
    %166 = vector.shape_cast %165 : vector<1x8x32xi1> to vector<8x32xi1>
    %167 = arith.select %166, %164, %132 : vector<8x32xi1>, vector<8x32xf32>
    %168 = arith.truncf %167 : vector<8x32xf32> to vector<8x32xbf16>
    %cst_53 = arith.constant dense<0.000000e+00> : vector<8x32xf32>
    %169 = tpu.matmul %168, %23, %cst_53 {dimension_numbers = #tpu.dot_dimension_numbers<[1], [0], [0], [1], [0, 0, 1, 1], [], []>} : vector<8x32xbf16>, vector<32x32xbf16>, vector<8x32xf32> -> vector<8x32xf32>
    %cst_54 = arith.constant dense<0.000000e+00> : vector<8x32xf32>
    %170 = tpu.matmul %168, %24, %cst_54 {dimension_numbers = #tpu.dot_dimension_numbers<[1], [0], [0], [1], [0, 0, 1, 1], [], []>} : vector<8x32xbf16>, vector<32x32xbf16>, vector<8x32xf32> -> vector<8x32xf32>
    %cst_55 = arith.constant dense<0.000000e+00> : vector<8x32xf32>
    %171 = tpu.matmul %168, %25, %cst_55 {dimension_numbers = #tpu.dot_dimension_numbers<[1], [0], [0], [1], [0, 0, 1, 1], [], []>} : vector<8x32xbf16>, vector<32x32xbf16>, vector<8x32xf32> -> vector<8x32xf32>
    %172 = vector.extract_strided_slice %7 {offsets = [4, 0, 0], sizes = [1, 8, 32], strides = [1, 1, 1]} : vector<5x8x32xf32> to vector<1x8x32xf32>
    %173 = vector.shape_cast %172 : vector<1x8x32xf32> to vector<8x32xf32>
    %174 = arith.addf %173, %169 : vector<8x32xf32>
    %175 = arith.negf %174 : vector<8x32xf32>
    %176 = math.exp %175 : vector<8x32xf32>
    %cst_56 = arith.constant 1.000000e+00 : f32
    %177 = vector.broadcast %cst_56 : f32 to vector<8x32xf32>
    %178 = arith.addf %177, %176 : vector<8x32xf32>
    %179 = arith.divf %177, %178 : vector<8x32xf32>
    %180 = vector.extract_strided_slice %13 {offsets = [4, 0, 0], sizes = [1, 8, 32], strides = [1, 1, 1]} : vector<5x8x32xf32> to vector<1x8x32xf32>
    %181 = vector.shape_cast %180 : vector<1x8x32xf32> to vector<8x32xf32>
    %182 = arith.addf %181, %170 : vector<8x32xf32>
    %183 = arith.negf %182 : vector<8x32xf32>
    %184 = math.exp %183 : vector<8x32xf32>
    %cst_57 = arith.constant 1.000000e+00 : f32
    %185 = vector.broadcast %cst_57 : f32 to vector<8x32xf32>
    %186 = arith.addf %185, %184 : vector<8x32xf32>
    %187 = arith.divf %185, %186 : vector<8x32xf32>
    %188 = vector.extract_strided_slice %19 {offsets = [4, 0, 0], sizes = [1, 8, 32], strides = [1, 1, 1]} : vector<5x8x32xf32> to vector<1x8x32xf32>
    %189 = vector.shape_cast %188 : vector<1x8x32xf32> to vector<8x32xf32>
    %190 = vector.broadcast %26 : vector<1x32xf32> to vector<8x32xf32>
    %191 = arith.addf %171, %190 : vector<8x32xf32>
    %192 = arith.mulf %179, %191 : vector<8x32xf32>
    %193 = arith.addf %189, %192 : vector<8x32xf32>
    %194 = math.tanh %193 : vector<8x32xf32>
    %cst_58 = arith.constant 1.000000e+00 : f32
    %195 = vector.broadcast %cst_58 : f32 to vector<8x32xf32>
    %196 = arith.subf %195, %187 : vector<8x32xf32>
    %197 = arith.mulf %196, %194 : vector<8x32xf32>
    %198 = arith.mulf %187, %167 : vector<8x32xf32>
    %199 = arith.addf %197, %198 : vector<8x32xf32>
    %200 = vector.extract_strided_slice %22 {offsets = [4, 0, 0], sizes = [1, 8, 32], strides = [1, 1, 1]} : vector<5x8x32xi1> to vector<1x8x32xi1>
    %201 = vector.shape_cast %200 : vector<1x8x32xi1> to vector<8x32xi1>
    %202 = arith.select %201, %199, %167 : vector<8x32xi1>, vector<8x32xf32>
    %c0_59 = arith.constant 0 : index
    %c0_60 = arith.constant 0 : index
    %203 = vector.load %arg20[%c0_59, %c0_60] : memref<8x32xf32, #tpu.memory_space<vmem>>, vector<8x32xf32>
    tpu.vector_store %arg20[%c0_59, %c0_60], %202 {strides = array<i32>} : memref<8x32xf32, #tpu.memory_space<vmem>>, vector<8x32xf32>,
    %204 = arith.truncf %202 : vector<8x32xf32> to vector<8x32xbf16>
    %c0_61 = arith.constant 0 : index
    %c0_62 = arith.constant 0 : index
    %205 = vector.load %arg14[%c0_61, %c0_62] : memref<32x32xbf16, #tpu.memory_space<vmem>>, vector<32x32xbf16>
    %cst_63 = arith.constant dense<0.000000e+00> : vector<8x32xf32>
    %206 = tpu.matmul %204, %205, %cst_63 {dimension_numbers = #tpu.dot_dimension_numbers<[1], [0], [0], [1], [0, 0, 1, 1], [], []>} : vector<8x32xbf16>, vector<32x32xbf16>, vector<8x32xf32> -> vector<8x32xf32>
    %c0_64 = arith.constant 0 : index
    %c0_65 = arith.constant 0 : index
    %207 = vector.load %arg15[%c0_64, %c0_65] : memref<1x32xf32, #tpu.memory_space<vmem>>, vector<1x32xf32>
    %208 = vector.broadcast %207 : vector<1x32xf32> to vector<8x32xf32>
    %209 = arith.addf %206, %208 : vector<8x32xf32>
    %cst_66 = arith.constant 0.000000e+00 : f32
    %210 = vector.broadcast %cst_66 : f32 to vector<8x32xf32>
    %211 = arith.maximumf %209, %210 : vector<8x32xf32>
    %212 = arith.truncf %211 : vector<8x32xf32> to vector<8x32xbf16>
    %c0_67 = arith.constant 0 : index
    %c0_68 = arith.constant 0 : index
    %213 = vector.load %arg16[%c0_67, %c0_68] : memref<32x8xbf16, #tpu.memory_space<vmem>>, vector<32x8xbf16>
    %cst_69 = arith.constant dense<0.000000e+00> : vector<8x8xf32>
    %214 = tpu.matmul %212, %213, %cst_69 {dimension_numbers = #tpu.dot_dimension_numbers<[1], [0], [0], [1], [0, 0, 1, 1], [], []>} : vector<8x32xbf16>, vector<32x8xbf16>, vector<8x8xf32> -> vector<8x8xf32>
    %c0_70 = arith.constant 0 : index
    %c0_71 = arith.constant 0 : index
    %215 = vector.load %arg17[%c0_70, %c0_71] : memref<1x8xf32, #tpu.memory_space<vmem>>, vector<1x8xf32>
    %216 = vector.broadcast %215 : vector<1x8xf32> to vector<8x8xf32>
    %217 = arith.addf %214, %216 : vector<8x8xf32>
    %218 = arith.negf %217 : vector<8x8xf32>
    %219 = math.exp %218 : vector<8x8xf32>
    %cst_72 = arith.constant 1.000000e+00 : f32
    %220 = vector.broadcast %cst_72 : f32 to vector<8x8xf32>
    %221 = arith.addf %220, %219 : vector<8x8xf32>
    %222 = arith.divf %220, %221 : vector<8x8xf32>
    %c0_73 = arith.constant 0 : index
    %c0_74 = arith.constant 0 : index
    %223 = vector.load %arg19[%c0_73, %c0_74] : memref<8x8xf32, #tpu.memory_space<vmem>>, vector<8x8xf32>
    tpu.vector_store %arg19[%c0_73, %c0_74], %222 {strides = array<i32>} : memref<8x8xf32, #tpu.memory_space<vmem>>, vector<8x8xf32>,
    %c0_75 = arith.constant 0 : index
    %c0_76 = arith.constant 0 : index
    %224 = vector.load %arg3[%c0_75, %c0_76] : memref<8x8xf32, #tpu.memory_space<vmem>>, vector<8x8xf32>
    %cst_77 = arith.constant 9.99999991E-38 : f32
    %225 = vector.broadcast %cst_77 : f32 to vector<8x8xf32>
    %226 = arith.maximumf %222, %225 : vector<8x8xf32>
    %227 = math.log %226 : vector<8x8xf32>
    %cst_78 = arith.constant -1.000000e+02 : f32
    %228 = vector.broadcast %cst_78 : f32 to vector<8x8xf32>
    %229 = arith.maximumf %227, %228 : vector<8x8xf32>
    %cst_79 = arith.constant 1.000000e+00 : f32
    %230 = vector.broadcast %cst_79 : f32 to vector<8x8xf32>
    %231 = arith.subf %230, %222 : vector<8x8xf32>
    %cst_80 = arith.constant 9.99999991E-38 : f32
    %232 = vector.broadcast %cst_80 : f32 to vector<8x8xf32>
    %233 = arith.maximumf %231, %232 : vector<8x8xf32>
    %234 = math.log %233 : vector<8x8xf32>
    %cst_81 = arith.constant -1.000000e+02 : f32
    %235 = vector.broadcast %cst_81 : f32 to vector<8x8xf32>
    %236 = arith.maximumf %234, %235 : vector<8x8xf32>
    %237 = arith.mulf %224, %229 : vector<8x8xf32>
    %cst_82 = arith.constant 1.000000e+00 : f32
    %238 = vector.broadcast %cst_82 : f32 to vector<8x8xf32>
    %239 = arith.subf %238, %224 : vector<8x8xf32>
    %240 = arith.mulf %239, %236 : vector<8x8xf32>
    %241 = arith.addf %237, %240 : vector<8x8xf32>
    %cst_83 = arith.constant 0.000000e+00 : f32
    %242 = vector.broadcast %cst_83 : f32 to vector<8x8xf32>
    %243 = arith.subf %242, %241 : vector<8x8xf32>
    %c0_84 = arith.constant 0 : index
    %c0_85 = arith.constant 0 : index
    %244 = vector.load %arg18[%c0_84, %c0_85] : memref<8x8xf32, #tpu.memory_space<vmem>>, vector<8x8xf32>
    tpu.vector_store %arg18[%c0_84, %c0_85], %243 {strides = array<i32>} : memref<8x8xf32, #tpu.memory_space<vmem>>, vector<8x8xf32>,
    return
  }
  func.func @transform_0(%arg0: i32) -> (i32, i32, i32) {
    %c0_i32 = arith.constant 0 : i32
    %c0_i32_0 = arith.constant 0 : i32
    %c0_i32_1 = arith.constant 0 : i32
    return %c0_i32, %arg0, %c0_i32_0 : i32, i32, i32
  }
  func.func @transform_1(%arg0: i32) -> (i32, i32, i32) {
    %c0_i32 = arith.constant 0 : i32
    %c0_i32_0 = arith.constant 0 : i32
    %c0_i32_1 = arith.constant 0 : i32
    return %c0_i32, %arg0, %c0_i32_0 : i32, i32, i32
  }
  func.func @transform_2(%arg0: i32) -> (i32, i32) {
    %c0_i32 = arith.constant 0 : i32
    %c0_i32_0 = arith.constant 0 : i32
    return %arg0, %c0_i32 : i32, i32
  }
  func.func @transform_3(%arg0: i32) -> (i32, i32) {
    %c0_i32 = arith.constant 0 : i32
    %c0_i32_0 = arith.constant 0 : i32
    %c0_i32_1 = arith.constant 0 : i32
    return %c0_i32, %c0_i32_0 : i32, i32
  }
  func.func @transform_4(%arg0: i32) -> (i32, i32) {
    %c0_i32 = arith.constant 0 : i32
    %c0_i32_0 = arith.constant 0 : i32
    %c0_i32_1 = arith.constant 0 : i32
    return %c0_i32, %c0_i32_0 : i32, i32
  }
  func.func @transform_5(%arg0: i32) -> (i32, i32) {
    %c0_i32 = arith.constant 0 : i32
    %c0_i32_0 = arith.constant 0 : i32
    %c0_i32_1 = arith.constant 0 : i32
    return %c0_i32, %c0_i32_0 : i32, i32
  }
  func.func @transform_6(%arg0: i32) -> (i32, i32) {
    %c0_i32 = arith.constant 0 : i32
    %c0_i32_0 = arith.constant 0 : i32
    %c0_i32_1 = arith.constant 0 : i32
    return %c0_i32, %c0_i32_0 : i32, i32
  }
  func.func @transform_7(%arg0: i32) -> (i32, i32) {
    %c0_i32 = arith.constant 0 : i32
    %c0_i32_0 = arith.constant 0 : i32
    %c0_i32_1 = arith.constant 0 : i32
    return %c0_i32, %c0_i32_0 : i32, i32
  }
  func.func @transform_8(%arg0: i32) -> (i32, i32) {
    %c0_i32 = arith.constant 0 : i32
    %c0_i32_0 = arith.constant 0 : i32
    %c0_i32_1 = arith.constant 0 : i32
    return %c0_i32, %c0_i32_0 : i32, i32
  }
  func.func @transform_9(%arg0: i32) -> (i32, i32) {
    %c0_i32 = arith.constant 0 : i32
    %c0_i32_0 = arith.constant 0 : i32
    %c0_i32_1 = arith.constant 0 : i32
    return %c0_i32, %c0_i32_0 : i32, i32
  }
  func.func @transform_10(%arg0: i32) -> (i32, i32) {
    %c0_i32 = arith.constant 0 : i32
    %c0_i32_0 = arith.constant 0 : i32
    %c0_i32_1 = arith.constant 0 : i32
    return %c0_i32, %c0_i32_0 : i32, i32
  }
  func.func @transform_11(%arg0: i32) -> (i32, i32) {
    %c0_i32 = arith.constant 0 : i32
    %c0_i32_0 = arith.constant 0 : i32
    %c0_i32_1 = arith.constant 0 : i32
    return %c0_i32, %c0_i32_0 : i32, i32
  }
  func.func @transform_12(%arg0: i32) -> (i32, i32) {
    %c0_i32 = arith.constant 0 : i32
    %c0_i32_0 = arith.constant 0 : i32
    %c0_i32_1 = arith.constant 0 : i32
    return %c0_i32, %c0_i32_0 : i32, i32
  }
  func.func @transform_13(%arg0: i32) -> (i32, i32) {
    %c0_i32 = arith.constant 0 : i32
    %c0_i32_0 = arith.constant 0 : i32
    %c0_i32_1 = arith.constant 0 : i32
    return %c0_i32, %c0_i32_0 : i32, i32
  }
  func.func @transform_14(%arg0: i32) -> (i32, i32) {
    %c0_i32 = arith.constant 0 : i32
    %c0_i32_0 = arith.constant 0 : i32
    %c0_i32_1 = arith.constant 0 : i32
    return %c0_i32, %c0_i32_0 : i32, i32
  }
  func.func @transform_15(%arg0: i32) -> (i32, i32) {
    %c0_i32 = arith.constant 0 : i32
    %c0_i32_0 = arith.constant 0 : i32
    %c0_i32_1 = arith.constant 0 : i32
    return %c0_i32, %c0_i32_0 : i32, i32
  }
  func.func @transform_16(%arg0: i32) -> (i32, i32) {
    %c0_i32 = arith.constant 0 : i32
    %c0_i32_0 = arith.constant 0 : i32
    %c0_i32_1 = arith.constant 0 : i32
    return %c0_i32, %c0_i32_0 : i32, i32
  }
  func.func @transform_17(%arg0: i32) -> (i32, i32) {
    %c0_i32 = arith.constant 0 : i32
    %c0_i32_0 = arith.constant 0 : i32
    return %arg0, %c0_i32 : i32, i32
  }
  func.func @transform_18(%arg0: i32) -> (i32, i32) {
    %c0_i32 = arith.constant 0 : i32
    %c0_i32_0 = arith.constant 0 : i32
    return %arg0, %c0_i32 : i32, i32
  }
  func.func @transform_19(%arg0: i32) -> (i32, i32) {
    %c0_i32 = arith.constant 0 : i32
    %c0_i32_0 = arith.constant 0 : i32
    return %arg0, %c0_i32 : i32, i32
  }
}

</mosaic_0001>

<llo_original>
// kernel: tpu_custom_call.1
$region0: #{tpu_custom_call.1}
  #allocation0 [shape = 'u32[]', space=smem, size = 0x4, offset = 0x4, fixed_abs, tag = 'smem constant byte address 0x4 - core index']
  #allocation1 [shape = 'u32[72,128]{1,0:T(1,128)}', space=vmem, size = 0x9000, scoped, tag = 'internal scratch']
  %s0 = inlined_call_operand.vmem [shape: bf16[5,8,64], index: 0, kind: input, shape index: {}]
  %s1 = inlined_call_operand.vmem [shape: f32[5,8,32], index: 1, kind: input, shape index: {}]
  %s2 = inlined_call_operand.vmem [shape: f32[8,8], index: 2, kind: input, shape index: {}]
  %s3 = inlined_call_operand.vmem [shape: bf16[64,32], index: 3, kind: input, shape index: {}]
  %s4 = inlined_call_operand.vmem [shape: bf16[64,32], index: 4, kind: input, shape index: {}]
  %s5 = inlined_call_operand.vmem [shape: bf16[64,32], index: 5, kind: input, shape index: {}]
  %s6 = inlined_call_operand.vmem [shape: bf16[32,32], index: 6, kind: input, shape index: {}]
  %s7 = inlined_call_operand.vmem [shape: bf16[32,32], index: 7, kind: input, shape index: {}]
  %s8 = inlined_call_operand.vmem [shape: bf16[32,32], index: 8, kind: input, shape index: {}]
  %s9 = inlined_call_operand.vmem [shape: f32[1,32], index: 9, kind: input, shape index: {}]
  %s10 = inlined_call_operand.vmem [shape: f32[1,32], index: 10, kind: input, shape index: {}]
  %s11 = inlined_call_operand.vmem [shape: f32[1,32], index: 11, kind: input, shape index: {}]
  %s12 = inlined_call_operand.vmem [shape: f32[1,32], index: 12, kind: input, shape index: {}]
  %s13 = inlined_call_operand.hbm [shape: bf16[32,32], index: 13, kind: input, shape index: {}]
  %s14 = inlined_call_operand.vmem [shape: f32[1,32], index: 14, kind: input, shape index: {}]
  %s15 = inlined_call_operand.vmem [shape: bf16[32,8], index: 15, kind: input, shape index: {}]
  %s16 = inlined_call_operand.vmem [shape: f32[1,8], index: 16, kind: input, shape index: {}]
  %s17 = inlined_call_operand.hbm [shape: f32[8,8], index: 17, kind: output, shape index: {0}]
  %s18 = inlined_call_operand.hbm [shape: f32[8,8], index: 18, kind: output, shape index: {1}]
  %s19 = inlined_call_operand.hbm [shape: f32[8,32], index: 19, kind: output, shape index: {2}]
  %20 = xla_tuple %s17, %s18, %s19
  %s21 = sld [smem:[#allocation0]]
  $region98: #{tpu_custom_call.1} parent=0
    _
  %s23 = ssub.s32 1, %s21
  %s24 = scalar_select 0, %s23, %s21
  $region1: #{tpu_custom_call.1} parent=0
    #allocation2 [shape = 'u8[8192]{0}', space=vmem, size = 0x2000, scoped, tag = 'input window, operand 13, single buffered']
    #allocation3 [shape = 's32[1]{0}', space=sflag, size = 0x4, scoped, tag = 'scoped memory for tpu_custom_call.1']
    #allocation4 [shape = 's32[1]{0}', space=sflag, size = 0x4, scoped, tag = 'scoped memory for tpu_custom_call.1']
    #allocation5 [shape = 'u8[4096]{0}', space=vmem, size = 0x1000, scoped, tag = 'output window, operand 0, single buffered']
    #allocation6 [shape = 'u8[4096]{0}', space=vmem, size = 0x1000, scoped, tag = 'output window, operand 1, single buffered']
    #allocation7 [shape = 's32[1]{0}', space=sflag, size = 0x4, scoped, tag = 'scoped memory for tpu_custom_call.1']
    #allocation8 [shape = 'u8[4096]{0}', space=vmem, size = 0x1000, scoped, tag = 'output window, operand 2, single buffered']
    %25 = vsyncpa [#allocation3], 0
    %26 = vsyncpa [#allocation4], 0
    %27 = vsyncpa [#allocation7], 0
    // Predicated region
    $region2: #{tpu_custom_call.1} parent=1 // pred_check
      _
    $region3: #{tpu_custom_call.1} parent=1 // pred_check_branch
      %29 = sbr.rel (0) target = $region5
    $region4: #{tpu_custom_call.1} parent=1 // pred_region
      _
    $region5: #{tpu_custom_call.1} parent=1 // pred_fallthru
      _
    // Predicated region
    $region6: #{tpu_custom_call.1} parent=1 // pred_check
      _
    $region7: #{tpu_custom_call.1} parent=1 // pred_check_branch
      %31 = sbr.rel (0) target = $region9
    $region8: #{tpu_custom_call.1} parent=1 // pred_region
      _
    $region9: #{tpu_custom_call.1} parent=1 // pred_fallthru
      _
    // Predicated region
    $region10: #{tpu_custom_call.1} parent=1 // pred_check
      _
    $region11: #{tpu_custom_call.1} parent=1 // pred_check_branch
      %33 = sbr.rel (0) target = $region13
    $region12: #{tpu_custom_call.1} parent=1 // pred_region
      _
    $region13: #{tpu_custom_call.1} parent=1 // pred_fallthru
      _
    // Predicated region
    $region14: #{tpu_custom_call.1} parent=1 // pred_check
      _
    $region15: #{tpu_custom_call.1} parent=1 // pred_check_branch
      %35 = sbr.rel (0) target = $region17
    $region16: #{tpu_custom_call.1} parent=1 // pred_region
      _
    $region17: #{tpu_custom_call.1} parent=1 // pred_fallthru
      _
    // Predicated region
    $region18: #{tpu_custom_call.1} parent=1 // pred_check
      _
    $region19: #{tpu_custom_call.1} parent=1 // pred_check_branch
      %37 = sbr.rel (0) target = $region21
    $region20: #{tpu_custom_call.1} parent=1 // pred_region
      _
    $region21: #{tpu_custom_call.1} parent=1 // pred_fallthru
      _
    // Predicated region
    $region22: #{tpu_custom_call.1} parent=1 // pred_check
      _
    $region23: #{tpu_custom_call.1} parent=1 // pred_check_branch
      %39 = sbr.rel (0) target = $region25
    $region24: #{tpu_custom_call.1} parent=1 // pred_region
      _
    $region25: #{tpu_custom_call.1} parent=1 // pred_fallthru
      _
    // Predicated region
    $region26: #{tpu_custom_call.1} parent=1 // pred_check
      _
    $region27: #{tpu_custom_call.1} parent=1 // pred_check_branch
      %41 = sbr.rel (0) target = $region29
    $region28: #{tpu_custom_call.1} parent=1 // pred_region
      _
    $region29: #{tpu_custom_call.1} parent=1 // pred_fallthru
      _
    // Predicated region
    $region30: #{tpu_custom_call.1} parent=1 // pred_check
      _
    $region31: #{tpu_custom_call.1} parent=1 // pred_check_branch
      %43 = sbr.rel (0) target = $region33
    $region32: #{tpu_custom_call.1} parent=1 // pred_region
      _
    $region33: #{tpu_custom_call.1} parent=1 // pred_fallthru
      _
    // Predicated region
    $region34: #{tpu_custom_call.1} parent=1 // pred_check
      _
    $region35: #{tpu_custom_call.1} parent=1 // pred_check_branch
      %45 = sbr.rel (0) target = $region37
    $region36: #{tpu_custom_call.1} parent=1 // pred_region
      _
    $region37: #{tpu_custom_call.1} parent=1 // pred_fallthru
      _
    // Predicated region
    $region38: #{tpu_custom_call.1} parent=1 // pred_check
      _
    $region39: #{tpu_custom_call.1} parent=1 // pred_check_branch
      %47 = sbr.rel (0) target = $region41
    $region40: #{tpu_custom_call.1} parent=1 // pred_region
      _
    $region41: #{tpu_custom_call.1} parent=1 // pred_fallthru
      _
    // Predicated region
    $region42: #{tpu_custom_call.1} parent=1 // pred_check
      _
    $region43: #{tpu_custom_call.1} parent=1 // pred_check_branch
      %49 = sbr.rel (0) target = $region45
    $region44: #{tpu_custom_call.1} parent=1 // pred_region
      _
    $region45: #{tpu_custom_call.1} parent=1 // pred_fallthru
      _
    // Predicated region
    $region46: #{tpu_custom_call.1} parent=1 // pred_check
      _
    $region47: #{tpu_custom_call.1} parent=1 // pred_check_branch
      %51 = sbr.rel (0) target = $region49
    $region48: #{tpu_custom_call.1} parent=1 // pred_region
      _
    $region49: #{tpu_custom_call.1} parent=1 // pred_fallthru
      _
    // Predicated region
    $region50: #{tpu_custom_call.1} parent=1 // pred_check
      _
    $region51: #{tpu_custom_call.1} parent=1 // pred_check_branch
      %53 = sbr.rel (0) target = $region53
    $region52: #{tpu_custom_call.1} parent=1 // pred_region
      _
    $region53: #{tpu_custom_call.1} parent=1 // pred_fallthru
      _
    // Predicated region
    $region54: #{tpu_custom_call.1} parent=1 // pred_check
      _
    $region55: #{tpu_custom_call.1} parent=1 // pred_check_branch
      %55 = sbr.rel (0) target = $region57
    $region56: #{tpu_custom_call.1} parent=1 // pred_region
      %57 = vsyncadd [#allocation3], 0
      %s58 = sshll.u32 %s13, 4
      %s59 = int_to_ptr.hbm [resolvable:$true] %s58
      %s60 = sshll.u32 [#allocation2], 4
      %s61 = int_to_ptr.vmem [resolvable:$true] %s60
      %66 = dma.hbm_to_vmem [thread:$0]  %s59, 256, %s61, [#allocation3], 64, 64, 4
    $region57: #{tpu_custom_call.1} parent=1 // pred_fallthru
      _
    // Predicated region
    $region58: #{tpu_custom_call.1} parent=1 // pred_check
      _
    $region59: #{tpu_custom_call.1} parent=1 // pred_check_branch
      %68 = sbr.rel (0) target = $region61
    $region60: #{tpu_custom_call.1} parent=1 // pred_region
      _
    $region61: #{tpu_custom_call.1} parent=1 // pred_fallthru
      _
    // Predicated region
    $region62: #{tpu_custom_call.1} parent=1 // pred_check
      _
    $region63: #{tpu_custom_call.1} parent=1 // pred_check_branch
      %70 = sbr.rel (0) target = $region65
    $region64: #{tpu_custom_call.1} parent=1 // pred_region
      _
    $region65: #{tpu_custom_call.1} parent=1 // pred_fallthru
      _
    // Predicated region
    $region66: #{tpu_custom_call.1} parent=1 // pred_check
      _
    $region67: #{tpu_custom_call.1} parent=1 // pred_check_branch
      %72 = sbr.rel (0) target = $region69
    $region68: #{tpu_custom_call.1} parent=1 // pred_region
      _
    $region69: #{tpu_custom_call.1} parent=1 // pred_fallthru
      _
    // Predicated region
    $region70: #{tpu_custom_call.1} parent=1 // pred_check
      _
    $region71: #{tpu_custom_call.1} parent=1 // pred_check_branch
      %74 = sbr.rel (0) target = $region73
    $region72: #{tpu_custom_call.1} parent=1 // pred_region
      %76 = dma.done [#allocation3], 256
    $region73: #{tpu_custom_call.1} parent=1 // pred_fallthru
      _
    %v78 = vld [vmem:[%s0] sm:$0xf]
    %v79 = vld [vmem:[%s0 + $0x4] sm:$0xf]
    %v80 = vld [vmem:[%s0 + $0x8] sm:$0xf]
    %v81 = vld [vmem:[%s0 + $0xc] sm:$0xf]
    %v82 = vld [vmem:[%s0 + $0x10] sm:$0xf]
    %v83 = vld [vmem:[%s3] sm:$0xf]
    %v84 = vld [vmem:[%s3 + $0x4] sm:$0xf]
    %v85 = vld [vmem:[%s3 + $0x8] sm:$0xf]
    %v86 = vld [vmem:[%s3 + $0xc] sm:$0xf]
    %v87 = vld [vmem:[%s3 + $0x10] sm:$0xf]
    %v88 = vld [vmem:[%s3 + $0x14] sm:$0xf]
    %v89 = vld [vmem:[%s3 + $0x18] sm:$0xf]
    %v90 = vld [vmem:[%s3 + $0x1c] sm:$0xf]
    %v91 = vld [vmem:[%s9] sm:$0x1]
    %v93 = vperm.slane %v91, 0
    %v100 = vunpack.c.l.b16 %v78
    %v101 = vunpack.c.l.b16 %v79
    %v102 = vunpack.c.l.b16 %v80
    %v103 = vunpack.c.l.b16 %v81
    %v104 = vunpack.c.l.b16 %v82
    %v105 = vpack.c.b16 %v101, %v100
    %v106 = vpack.c.b16 %v103, %v102
    %v107 = vpack.c.b16 %v104, %v104
    %v116 = vunpack.c.l.b16 %v83
    %v117 = vunpack.c.l.b16 %v84
    %v118 = vunpack.c.l.b16 %v85
    %v119 = vunpack.c.l.b16 %v86
    %v120 = vunpack.c.l.b16 %v87
    %v121 = vunpack.c.l.b16 %v88
    %v122 = vunpack.c.l.b16 %v89
    %v123 = vunpack.c.l.b16 %v90
    %v124 = vpack.c.b16 %v117, %v116
    %v125 = vpack.c.b16 %v119, %v118
    %v126 = vpack.c.b16 %v121, %v120
    %v127 = vpack.c.b16 %v123, %v122
    %vm132 = vcmask 523264
    %v134 = vsel %vm132, %v105, 0
    %v137 = vsel %vm132, %v106, 0
    %v140 = vsel %vm132, %v107, 0
    %142 = vmatpush.bf16.msra.mxu0 0
    %143 = vmatpush.bf16.msra.mxu0 0
    %144 = vmatpush.bf16.msra.mxu0 0
    %145 = vmatpush.bf16.msra.mxu0 0
    %146 = vmatpush.bf16.msra.mxu0 %v127
    %147 = vmatpush.bf16.msra.mxu0 %v126
    %148 = vmatpush.bf16.msra.mxu0 %v125
    %149 = vmatpush.bf16.msra.mxu0 %v124
    %150 = vmatmul.bf16.gmra.mxu0 %v134
    %v151 = vpop.f32.mrf.mxu0
    %v152 = vadd.f32 %v93, %v151
    %v153 = vpop.f32.mrf.mxu0
    %v154 = vadd.f32 %v93, %v153
    %155 = vmatmul.bf16.gmra.mxu0 %v137
    %v156 = vpop.f32.mrf.mxu0
    %v157 = vadd.f32 %v93, %v156
    %v158 = vpop.f32.mrf.mxu0
    %v159 = vadd.f32 %v93, %v158
    %160 = vmatmul.bf16.gmra.mxu0 %v140
    %v161 = vpop.f32.mrf.mxu0
    %v162 = vadd.f32 %v93, %v161
    %v163 = vpop.f32.mrf.mxu0
    %164 = vdwg.mxu0
    %v165 = vld [vmem:[%s4] sm:$0xf]
    %v166 = vld [vmem:[%s4 + $0x4] sm:$0xf]
    %v167 = vld [vmem:[%s4 + $0x8] sm:$0xf]
    %v168 = vld [vmem:[%s4 + $0xc] sm:$0xf]
    %v169 = vld [vmem:[%s4 + $0x10] sm:$0xf]
    %v170 = vld [vmem:[%s4 + $0x14] sm:$0xf]
    %v171 = vld [vmem:[%s4 + $0x18] sm:$0xf]
    %v172 = vld [vmem:[%s4 + $0x1c] sm:$0xf]
    %v173 = vld [vmem:[%s10] sm:$0x1]
    %v175 = vperm.slane %v173, 0
    %v185 = vunpack.c.l.b16 %v165
    %v186 = vunpack.c.l.b16 %v166
    %v187 = vunpack.c.l.b16 %v167
    %v188 = vunpack.c.l.b16 %v168
    %v189 = vunpack.c.l.b16 %v169
    %v190 = vunpack.c.l.b16 %v170
    %v191 = vunpack.c.l.b16 %v171
    %v192 = vunpack.c.l.b16 %v172
    %v193 = vpack.c.b16 %v186, %v185
    %v194 = vpack.c.b16 %v188, %v187
    %v195 = vpack.c.b16 %v190, %v189
    %v196 = vpack.c.b16 %v192, %v191
    %201 = vmatpush.bf16.msra.mxu0 0
    %202 = vmatpush.bf16.msra.mxu0 0
    %203 = vmatpush.bf16.msra.mxu0 0
    %204 = vmatpush.bf16.msra.mxu0 0
    %205 = vmatpush.bf16.msra.mxu0 %v196
    %206 = vmatpush.bf16.msra.mxu0 %v195
    %207 = vmatpush.bf16.msra.mxu0 %v194
    %208 = vmatpush.bf16.msra.mxu0 %v193
    %209 = vmatmul.bf16.gmra.mxu0 %v134
    %v210 = vpop.f32.mrf.mxu0
    %v211 = vadd.f32 %v175, %v210
    %v212 = vpop.f32.mrf.mxu0
    %v213 = vadd.f32 %v175, %v212
    %214 = vmatmul.bf16.gmra.mxu0 %v137
    %v215 = vpop.f32.mrf.mxu0
    %v216 = vadd.f32 %v175, %v215
    %v217 = vpop.f32.mrf.mxu0
    %v218 = vadd.f32 %v175, %v217
    %219 = vmatmul.bf16.gmra.mxu0 %v140
    %v220 = vpop.f32.mrf.mxu0
    %v221 = vadd.f32 %v175, %v220
    %v222 = vpop.f32.mrf.mxu0
    %223 = vdwg.mxu0
    %v224 = vld [vmem:[%s5] sm:$0xf]
    %v225 = vld [vmem:[%s5 + $0x4] sm:$0xf]
    %v226 = vld [vmem:[%s5 + $0x8] sm:$0xf]
    %v227 = vld [vmem:[%s5 + $0xc] sm:$0xf]
    %v228 = vld [vmem:[%s5 + $0x10] sm:$0xf]
    %v229 = vld [vmem:[%s5 + $0x14] sm:$0xf]
    %v230 = vld [vmem:[%s5 + $0x18] sm:$0xf]
    %v231 = vld [vmem:[%s5 + $0x1c] sm:$0xf]
    %v232 = vld [vmem:[%s11] sm:$0x1]
    %v234 = vperm.slane %v232, 0
    %v244 = vunpack.c.l.b16 %v224
    %v245 = vunpack.c.l.b16 %v225
    %v246 = vunpack.c.l.b16 %v226
    %v247 = vunpack.c.l.b16 %v227
    %v248 = vunpack.c.l.b16 %v228
    %v249 = vunpack.c.l.b16 %v229
    %v250 = vunpack.c.l.b16 %v230
    %v251 = vunpack.c.l.b16 %v231
    %v252 = vpack.c.b16 %v245, %v244
    %v253 = vpack.c.b16 %v247, %v246
    %v254 = vpack.c.b16 %v249, %v248
    %v255 = vpack.c.b16 %v251, %v250
    %260 = vmatpush.bf16.msra.mxu0 0
    %261 = vmatpush.bf16.msra.mxu0 0
    %262 = vmatpush.bf16.msra.mxu0 0
    %263 = vmatpush.bf16.msra.mxu0 0
    %264 = vmatpush.bf16.msra.mxu0 %v255
    %265 = vmatpush.bf16.msra.mxu0 %v254
    %266 = vmatpush.bf16.msra.mxu0 %v253
    %267 = vmatpush.bf16.msra.mxu0 %v252
    %268 = vmatmul.bf16.gmra.mxu0 %v134
    %v269 = vpop.f32.mrf.mxu0
    %v270 = vadd.f32 %v234, %v269
    %v271 = vpop.f32.mrf.mxu0
    %v272 = vadd.f32 %v234, %v271
    %273 = vmatmul.bf16.gmra.mxu0 %v137
    %v274 = vpop.f32.mrf.mxu0
    %v275 = vadd.f32 %v234, %v274
    %v276 = vpop.f32.mrf.mxu0
    %v277 = vadd.f32 %v234, %v276
    %278 = vmatmul.bf16.gmra.mxu0 %v140
    %v279 = vpop.f32.mrf.mxu0
    %v280 = vadd.f32 %v234, %v279
    %v281 = vpop.f32.mrf.mxu0
    %282 = vdwg.mxu0
    %v283 = vld [vmem:[%s1] sm:$0xff]
    %v284 = vld [vmem:[%s1 + $0x8] sm:$0xff]
    %v285 = vld [vmem:[%s1 + $0x10] sm:$0xff]
    %v286 = vld [vmem:[%s1 + $0x18] sm:$0xff]
    %v287 = vld [vmem:[%s1 + $0x20] sm:$0xff]
    %vm288 = vcmp.ne.f32.partialorder %v283, 0.0
    %vm289 = vcmp.ne.f32.partialorder %v284, 0.0
    %vm290 = vcmp.ne.f32.partialorder %v285, 0.0
    %vm291 = vcmp.ne.f32.partialorder %v286, 0.0
    %vm292 = vcmp.ne.f32.partialorder %v287, 0.0
    %v293 = vld [vmem:[%s6] sm:$0xf]
    %v294 = vld [vmem:[%s6 + $0x4] sm:$0xf]
    %v295 = vld [vmem:[%s6 + $0x8] sm:$0xf]
    %v296 = vld [vmem:[%s6 + $0xc] sm:$0xf]
    %v297 = vld [vmem:[%s7] sm:$0xf]
    %v298 = vld [vmem:[%s7 + $0x4] sm:$0xf]
    %v299 = vld [vmem:[%s7 + $0x8] sm:$0xf]
    %v300 = vld [vmem:[%s7 + $0xc] sm:$0xf]
    %v301 = vld [vmem:[%s8] sm:$0xf]
    %v302 = vld [vmem:[%s8 + $0x4] sm:$0xf]
    %v303 = vld [vmem:[%s8 + $0x8] sm:$0xf]
    %v304 = vld [vmem:[%s8 + $0xc] sm:$0xf]
    %v305 = vld [vmem:[%s12] sm:$0x1]
    %v310 = vunpack.c.l.b16 %v293
    %v311 = vunpack.c.l.b16 %v294
    %v312 = vunpack.c.l.b16 %v295
    %v313 = vunpack.c.l.b16 %v296
    %v314 = vpack.c.b16 %v311, %v310
    %v315 = vpack.c.b16 %v313, %v312
    %vm318 = vcmask 261120
    %v320 = vsel %vm318, 0, 0
    %322 = vmatpush.bf16.msra.mxu0 0
    %323 = vmatpush.bf16.msra.mxu0 0
    %324 = vmatpush.bf16.msra.mxu0 0
    %325 = vmatpush.bf16.msra.mxu0 0
    %326 = vmatpush.bf16.msra.mxu0 0
    %327 = vmatpush.bf16.msra.mxu0 0
    %328 = vmatpush.bf16.msra.mxu0 %v315
    %329 = vmatpush.bf16.msra.mxu0 %v314
    %330 = vmatmul.bf16.gmra.mxu0 %v320
    %v331 = vpop.f32.mrf.mxu0
    %v332 = vadd.f32 0.0, %v331
    %v333 = vpop.f32.mrf.mxu0
    %334 = vdwg.mxu0
    %v339 = vunpack.c.l.b16 %v297
    %v340 = vunpack.c.l.b16 %v298
    %v341 = vunpack.c.l.b16 %v299
    %v342 = vunpack.c.l.b16 %v300
    %v343 = vpack.c.b16 %v340, %v339
    %v344 = vpack.c.b16 %v342, %v341
    %347 = vmatpush.bf16.msra.mxu0 0
    %348 = vmatpush.bf16.msra.mxu0 0
    %349 = vmatpush.bf16.msra.mxu0 0
    %350 = vmatpush.bf16.msra.mxu0 0
    %351 = vmatpush.bf16.msra.mxu0 0
    %352 = vmatpush.bf16.msra.mxu0 0
    %353 = vmatpush.bf16.msra.mxu0 %v344
    %354 = vmatpush.bf16.msra.mxu0 %v343
    %355 = vmatmul.bf16.gmra.mxu0 %v320
    %v356 = vpop.f32.mrf.mxu0
    %v357 = vadd.f32 0.0, %v356
    %v358 = vpop.f32.mrf.mxu0
    %359 = vdwg.mxu0
    %v360 = vadd.f32 %v152, %v332
    %v361 = vxor.u32 %v360, 2147483648
    %v362 = vmul.f32 %v361, 1.442695
    %v363 = vpow.pop %v362
    %v364 = vadd.f32 %v363, 1.0
    %v365 = vrcp.pop %v364
    %v366 = vmul.f32 %v364, %v365
    %v367 = vsub.f32 1.0, %v366
    %v368 = vmul.f32 %v365, %v367
    %v369 = vadd.f32 %v365, %v368
    %vm370 = vweird.f32 %v364
    %vm371 = vweird.f32 %v365
    %vm372 = vmor %vm370, %vm371
    %v373 = vsel %vm372, %v365, %v369
    %v374 = vand.u32 2147483647, %v364
    %vm375 = vcmp.eq.f32.partialorder %v374, 8.507059e+37
    %v376 = vand.u32 %v364, 2147483648
    %v377 = vor.u32 1.1754944e-38, %v376
    %v378 = vsel %vm375, %v377, %v373
    %v379 = vmul.f32 1.0, %v378
    %v380 = vadd.f32 %v211, %v357
    %v381 = vxor.u32 %v380, 2147483648
    %v382 = vmul.f32 %v381, 1.442695
    %v383 = vpow.pop %v382
    %v384 = vadd.f32 %v383, 1.0
    %v385 = vrcp.pop %v384
    %v386 = vmul.f32 %v384, %v385
    %v387 = vsub.f32 1.0, %v386
    %v388 = vmul.f32 %v385, %v387
    %v389 = vadd.f32 %v385, %v388
    %vm390 = vweird.f32 %v384
    %vm391 = vweird.f32 %v385
    %vm392 = vmor %vm390, %vm391
    %v393 = vsel %vm392, %v385, %v389
    %v394 = vand.u32 2147483647, %v384
    %vm395 = vcmp.eq.f32.partialorder %v394, 8.507059e+37
    %v396 = vand.u32 %v384, 2147483648
    %v397 = vor.u32 1.1754944e-38, %v396
    %v398 = vsel %vm395, %v397, %v393
    %v399 = vmul.f32 1.0, %v398
    %v401 = vperm.slane %v305, 0
    %v407 = vunpack.c.l.b16 %v301
    %v408 = vunpack.c.l.b16 %v302
    %v409 = vunpack.c.l.b16 %v303
    %v410 = vunpack.c.l.b16 %v304
    %v411 = vpack.c.b16 %v408, %v407
    %v412 = vpack.c.b16 %v410, %v409
    %415 = vmatpush.bf16.msra.mxu0 0
    %416 = vmatpush.bf16.msra.mxu0 0
    %417 = vmatpush.bf16.msra.mxu0 0
    %418 = vmatpush.bf16.msra.mxu0 0
    %419 = vmatpush.bf16.msra.mxu0 0
    %420 = vmatpush.bf16.msra.mxu0 0
    %421 = vmatpush.bf16.msra.mxu0 %v412
    %422 = vmatpush.bf16.msra.mxu0 %v411
    %423 = vmatmul.bf16.gmra.mxu0 %v320
    %v424 = vpop.f32.mrf.mxu0
    %v425 = vadd.f32 %v401, %v424
    %v426 = vpop.f32.mrf.mxu0
    %427 = vdwg.mxu0
    %v428 = vmul.f32 %v379, %v425
    %v429 = vadd.f32 %v270, %v428
    %v430 = vtanh.pop %v429
    %v431 = vsub.f32 1.0, %v399
    %v432 = vmul.f32 %v431, %v430
    %v433 = vmul.f32 %v399, 0.0
    %v434 = vadd.f32 %v432, %v433
    %v435 = vsel %vm288, %v434, 0.0
    %v436 = vpack.c.bf16 %v435, %v435
    %v438 = vsel %vm318, %v436, 0
    %440 = vmatpush.bf16.msra.mxu0 0
    %441 = vmatpush.bf16.msra.mxu0 0
    %442 = vmatpush.bf16.msra.mxu0 0
    %443 = vmatpush.bf16.msra.mxu0 0
    %444 = vmatpush.bf16.msra.mxu0 0
    %445 = vmatpush.bf16.msra.mxu0 0
    %446 = vmatpush.bf16.msra.mxu0 %v315
    %447 = vmatpush.bf16.msra.mxu0 %v314
    %448 = vmatmul.bf16.gmra.mxu0 %v438
    %v449 = vpop.f32.mrf.mxu0
    %v450 = vadd.f32 0.0, %v449
    %v451 = vpop.f32.mrf.mxu0
    %452 = vdwg.mxu0
    %453 = vmatpush.bf16.msra.mxu0 0
    %454 = vmatpush.bf16.msra.mxu0 0
    %455 = vmatpush.bf16.msra.mxu0 0
    %456 = vmatpush.bf16.msra.mxu0 0
    %457 = vmatpush.bf16.msra.mxu0 0
    %458 = vmatpush.bf16.msra.mxu0 0
    %459 = vmatpush.bf16.msra.mxu0 %v344
    %460 = vmatpush.bf16.msra.mxu0 %v343
    %461 = vmatmul.bf16.gmra.mxu0 %v438
    %v462 = vpop.f32.mrf.mxu0
    %v463 = vadd.f32 0.0, %v462
    %v464 = vpop.f32.mrf.mxu0
    %465 = vdwg.mxu0
    %v466 = vadd.f32 %v154, %v450
    %v467 = vxor.u32 %v466, 2147483648
    %v468 = vmul.f32 %v467, 1.442695
    %v469 = vpow.pop %v468
    %v470 = vadd.f32 %v469, 1.0
    %v471 = vrcp.pop %v470
    %v472 = vmul.f32 %v470, %v471
    %v473 = vsub.f32 1.0, %v472
    %v474 = vmul.f32 %v471, %v473
    %v475 = vadd.f32 %v471, %v474
    %vm476 = vweird.f32 %v470
    %vm477 = vweird.f32 %v471
    %vm478 = vmor %vm476, %vm477
    %v479 = vsel %vm478, %v471, %v475
    %v480 = vand.u32 2147483647, %v470
    %vm481 = vcmp.eq.f32.partialorder %v480, 8.507059e+37
    %v482 = vand.u32 %v470, 2147483648
    %v483 = vor.u32 1.1754944e-38, %v482
    %v484 = vsel %vm481, %v483, %v479
    %v485 = vmul.f32 1.0, %v484
    %v486 = vadd.f32 %v213, %v463
    %v487 = vxor.u32 %v486, 2147483648
    %v488 = vmul.f32 %v487, 1.442695
    %v489 = vpow.pop %v488
    %v490 = vadd.f32 %v489, 1.0
    %v491 = vrcp.pop %v490
    %v492 = vmul.f32 %v490, %v491
    %v493 = vsub.f32 1.0, %v492
    %v494 = vmul.f32 %v491, %v493
    %v495 = vadd.f32 %v491, %v494
    %vm496 = vweird.f32 %v490
    %vm497 = vweird.f32 %v491
    %vm498 = vmor %vm496, %vm497
    %v499 = vsel %vm498, %v491, %v495
    %v500 = vand.u32 2147483647, %v490
    %vm501 = vcmp.eq.f32.partialorder %v500, 8.507059e+37
    %v502 = vand.u32 %v490, 2147483648
    %v503 = vor.u32 1.1754944e-38, %v502
    %v504 = vsel %vm501, %v503, %v499
    %v505 = vmul.f32 1.0, %v504
    %506 = vmatpush.bf16.msra.mxu0 0
    %507 = vmatpush.bf16.msra.mxu0 0
    %508 = vmatpush.bf16.msra.mxu0 0
    %509 = vmatpush.bf16.msra.mxu0 0
    %510 = vmatpush.bf16.msra.mxu0 0
    %511 = vmatpush.bf16.msra.mxu0 0
    %512 = vmatpush.bf16.msra.mxu0 %v412
    %513 = vmatpush.bf16.msra.mxu0 %v411
    %514 = vmatmul.bf16.gmra.mxu0 %v438
    %v515 = vpop.f32.mrf.mxu0
    %v516 = vadd.f32 %v401, %v515
    %v517 = vpop.f32.mrf.mxu0
    %518 = vdwg.mxu0
    %v519 = vmul.f32 %v485, %v516
    %v520 = vadd.f32 %v272, %v519
    %v521 = vtanh.pop %v520
    %v522 = vsub.f32 1.0, %v505
    %v523 = vmul.f32 %v522, %v521
    %v524 = vmul.f32 %v505, %v435
    %v525 = vadd.f32 %v523, %v524
    %v526 = vsel %vm289, %v525, %v435
    %v527 = vpack.c.bf16 %v526, %v526
    %v529 = vsel %vm318, %v527, 0
    %531 = vmatpush.bf16.msra.mxu0 0
    %532 = vmatpush.bf16.msra.mxu0 0
    %533 = vmatpush.bf16.msra.mxu0 0
    %534 = vmatpush.bf16.msra.mxu0 0
    %535 = vmatpush.bf16.msra.mxu0 0
    %536 = vmatpush.bf16.msra.mxu0 0
    %537 = vmatpush.bf16.msra.mxu0 %v315
    %538 = vmatpush.bf16.msra.mxu0 %v314
    %539 = vmatmul.bf16.gmra.mxu0 %v529
    %v540 = vpop.f32.mrf.mxu0
    %v541 = vadd.f32 0.0, %v540
    %v542 = vpop.f32.mrf.mxu0
    %543 = vdwg.mxu0
    %544 = vmatpush.bf16.msra.mxu0 0
    %545 = vmatpush.bf16.msra.mxu0 0
    %546 = vmatpush.bf16.msra.mxu0 0
    %547 = vmatpush.bf16.msra.mxu0 0
    %548 = vmatpush.bf16.msra.mxu0 0
    %549 = vmatpush.bf16.msra.mxu0 0
    %550 = vmatpush.bf16.msra.mxu0 %v344
    %551 = vmatpush.bf16.msra.mxu0 %v343
    %552 = vmatmul.bf16.gmra.mxu0 %v529
    %v553 = vpop.f32.mrf.mxu0
    %v554 = vadd.f32 0.0, %v553
    %v555 = vpop.f32.mrf.mxu0
    %556 = vdwg.mxu0
    %v557 = vadd.f32 %v157, %v541
    %v558 = vxor.u32 %v557, 2147483648
    %v559 = vmul.f32 %v558, 1.442695
    %v560 = vpow.pop %v559
    %v561 = vadd.f32 %v560, 1.0
    %v562 = vrcp.pop %v561
    %v563 = vmul.f32 %v561, %v562
    %v564 = vsub.f32 1.0, %v563
    %v565 = vmul.f32 %v562, %v564
    %v566 = vadd.f32 %v562, %v565
    %vm567 = vweird.f32 %v561
    %vm568 = vweird.f32 %v562
    %vm569 = vmor %vm567, %vm568
    %v570 = vsel %vm569, %v562, %v566
    %v571 = vand.u32 2147483647, %v561
    %vm572 = vcmp.eq.f32.partialorder %v571, 8.507059e+37
    %v573 = vand.u32 %v561, 2147483648
    %v574 = vor.u32 1.1754944e-38, %v573
    %v575 = vsel %vm572, %v574, %v570
    %v576 = vmul.f32 1.0, %v575
    %v577 = vadd.f32 %v216, %v554
    %v578 = vxor.u32 %v577, 2147483648
    %v579 = vmul.f32 %v578, 1.442695
    %v580 = vpow.pop %v579
    %v581 = vadd.f32 %v580, 1.0
    %v582 = vrcp.pop %v581
    %v583 = vmul.f32 %v581, %v582
    %v584 = vsub.f32 1.0, %v583
    %v585 = vmul.f32 %v582, %v584
    %v586 = vadd.f32 %v582, %v585
    %vm587 = vweird.f32 %v581
    %vm588 = vweird.f32 %v582
    %vm589 = vmor %vm587, %vm588
    %v590 = vsel %vm589, %v582, %v586
    %v591 = vand.u32 2147483647, %v581
    %vm592 = vcmp.eq.f32.partialorder %v591, 8.507059e+37
    %v593 = vand.u32 %v581, 2147483648
    %v594 = vor.u32 1.1754944e-38, %v593
    %v595 = vsel %vm592, %v594, %v590
    %v596 = vmul.f32 1.0, %v595
    %597 = vmatpush.bf16.msra.mxu0 0
    %598 = vmatpush.bf16.msra.mxu0 0
    %599 = vmatpush.bf16.msra.mxu0 0
    %600 = vmatpush.bf16.msra.mxu0 0
    %601 = vmatpush.bf16.msra.mxu0 0
    %602 = vmatpush.bf16.msra.mxu0 0
    %603 = vmatpush.bf16.msra.mxu0 %v412
    %604 = vmatpush.bf16.msra.mxu0 %v411
    %605 = vmatmul.bf16.gmra.mxu0 %v529
    %v606 = vpop.f32.mrf.mxu0
    %v607 = vadd.f32 %v401, %v606
    %v608 = vpop.f32.mrf.mxu0
    %609 = vdwg.mxu0
    %v610 = vmul.f32 %v576, %v607
    %v611 = vadd.f32 %v275, %v610
    %v612 = vtanh.pop %v611
    %v613 = vsub.f32 1.0, %v596
    %v614 = vmul.f32 %v613, %v612
    %v615 = vmul.f32 %v596, %v526
    %v616 = vadd.f32 %v614, %v615
    %v617 = vsel %vm290, %v616, %v526
    %v618 = vpack.c.bf16 %v617, %v617
    %v620 = vsel %vm318, %v618, 0
    %622 = vmatpush.bf16.msra.mxu0 0
    %623 = vmatpush.bf16.msra.mxu0 0
    %624 = vmatpush.bf16.msra.mxu0 0
    %625 = vmatpush.bf16.msra.mxu0 0
    %626 = vmatpush.bf16.msra.mxu0 0
    %627 = vmatpush.bf16.msra.mxu0 0
    %628 = vmatpush.bf16.msra.mxu0 %v315
    %629 = vmatpush.bf16.msra.mxu0 %v314
    %630 = vmatmul.bf16.gmra.mxu0 %v620
    %v631 = vpop.f32.mrf.mxu0
    %v632 = vadd.f32 0.0, %v631
    %v633 = vpop.f32.mrf.mxu0
    %634 = vdwg.mxu0
    %635 = vmatpush.bf16.msra.mxu0 0
    %636 = vmatpush.bf16.msra.mxu0 0
    %637 = vmatpush.bf16.msra.mxu0 0
    %638 = vmatpush.bf16.msra.mxu0 0
    %639 = vmatpush.bf16.msra.mxu0 0
    %640 = vmatpush.bf16.msra.mxu0 0
    %641 = vmatpush.bf16.msra.mxu0 %v344
    %642 = vmatpush.bf16.msra.mxu0 %v343
    %643 = vmatmul.bf16.gmra.mxu0 %v620
    %v644 = vpop.f32.mrf.mxu0
    %v645 = vadd.f32 0.0, %v644
    %v646 = vpop.f32.mrf.mxu0
    %647 = vdwg.mxu0
    %v648 = vadd.f32 %v159, %v632
    %v649 = vxor.u32 %v648, 2147483648
    %v650 = vmul.f32 %v649, 1.442695
    %v651 = vpow.pop %v650
    %v652 = vadd.f32 %v651, 1.0
    %v653 = vrcp.pop %v652
    %v654 = vmul.f32 %v652, %v653
    %v655 = vsub.f32 1.0, %v654
    %v656 = vmul.f32 %v653, %v655
    %v657 = vadd.f32 %v653, %v656
    %vm658 = vweird.f32 %v652
    %vm659 = vweird.f32 %v653
    %vm660 = vmor %vm658, %vm659
    %v661 = vsel %vm660, %v653, %v657
    %v662 = vand.u32 2147483647, %v652
    %vm663 = vcmp.eq.f32.partialorder %v662, 8.507059e+37
    %v664 = vand.u32 %v652, 2147483648
    %v665 = vor.u32 1.1754944e-38, %v664
    %v666 = vsel %vm663, %v665, %v661
    %v667 = vmul.f32 1.0, %v666
    %v668 = vadd.f32 %v218, %v645
    %v669 = vxor.u32 %v668, 2147483648
    %v670 = vmul.f32 %v669, 1.442695
    %v671 = vpow.pop %v670
    %v672 = vadd.f32 %v671, 1.0
    %v673 = vrcp.pop %v672
    %v674 = vmul.f32 %v672, %v673
    %v675 = vsub.f32 1.0, %v674
    %v676 = vmul.f32 %v673, %v675
    %v677 = vadd.f32 %v673, %v676
    %vm678 = vweird.f32 %v672
    %vm679 = vweird.f32 %v673
    %vm680 = vmor %vm678, %vm679
    %v681 = vsel %vm680, %v673, %v677
    %v682 = vand.u32 2147483647, %v672
    %vm683 = vcmp.eq.f32.partialorder %v682, 8.507059e+37
    %v684 = vand.u32 %v672, 2147483648
    %v685 = vor.u32 1.1754944e-38, %v684
    %v686 = vsel %vm683, %v685, %v681
    %v687 = vmul.f32 1.0, %v686
    %688 = vmatpush.bf16.msra.mxu0 0
    %689 = vmatpush.bf16.msra.mxu0 0
    %690 = vmatpush.bf16.msra.mxu0 0
    %691 = vmatpush.bf16.msra.mxu0 0
    %692 = vmatpush.bf16.msra.mxu0 0
    %693 = vmatpush.bf16.msra.mxu0 0
    %694 = vmatpush.bf16.msra.mxu0 %v412
    %695 = vmatpush.bf16.msra.mxu0 %v411
    %696 = vmatmul.bf16.gmra.mxu0 %v620
    %v697 = vpop.f32.mrf.mxu0
    %v698 = vadd.f32 %v401, %v697
    %v699 = vpop.f32.mrf.mxu0
    %700 = vdwg.mxu0
    %v701 = vmul.f32 %v667, %v698
    %v702 = vadd.f32 %v277, %v701
    %v703 = vtanh.pop %v702
    %v704 = vsub.f32 1.0, %v687
    %v705 = vmul.f32 %v704, %v703
    %v706 = vmul.f32 %v687, %v617
    %v707 = vadd.f32 %v705, %v706
    %v708 = vsel %vm291, %v707, %v617
    %v709 = vpack.c.bf16 %v708, %v708
    %v711 = vsel %vm318, %v709, 0
    %713 = vmatpush.bf16.msra.mxu0 0
    %714 = vmatpush.bf16.msra.mxu0 0
    %715 = vmatpush.bf16.msra.mxu0 0
    %716 = vmatpush.bf16.msra.mxu0 0
    %717 = vmatpush.bf16.msra.mxu0 0
    %718 = vmatpush.bf16.msra.mxu0 0
    %719 = vmatpush.bf16.msra.mxu0 %v315
    %720 = vmatpush.bf16.msra.mxu0 %v314
    %721 = vmatmul.bf16.gmra.mxu0 %v711
    %v722 = vpop.f32.mrf.mxu0
    %v723 = vadd.f32 0.0, %v722
    %v724 = vpop.f32.mrf.mxu0
    %725 = vdwg.mxu0
    %726 = vmatpush.bf16.msra.mxu0 0
    %727 = vmatpush.bf16.msra.mxu0 0
    %728 = vmatpush.bf16.msra.mxu0 0
    %729 = vmatpush.bf16.msra.mxu0 0
    %730 = vmatpush.bf16.msra.mxu0 0
    %731 = vmatpush.bf16.msra.mxu0 0
    %732 = vmatpush.bf16.msra.mxu0 %v344
    %733 = vmatpush.bf16.msra.mxu0 %v343
    %734 = vmatmul.bf16.gmra.mxu0 %v711
    %v735 = vpop.f32.mrf.mxu0
    %v736 = vadd.f32 0.0, %v735
    %v737 = vpop.f32.mrf.mxu0
    %738 = vdwg.mxu0
    %v739 = vadd.f32 %v162, %v723
    %v740 = vxor.u32 %v739, 2147483648
    %v741 = vmul.f32 %v740, 1.442695
    %v742 = vpow.pop %v741
    %v743 = vadd.f32 %v742, 1.0
    %v744 = vrcp.pop %v743
    %v745 = vmul.f32 %v743, %v744
    %v746 = vsub.f32 1.0, %v745
    %v747 = vmul.f32 %v744, %v746
    %v748 = vadd.f32 %v744, %v747
    %vm749 = vweird.f32 %v743
    %vm750 = vweird.f32 %v744
    %vm751 = vmor %vm749, %vm750
    %v752 = vsel %vm751, %v744, %v748
    %v753 = vand.u32 2147483647, %v743
    %vm754 = vcmp.eq.f32.partialorder %v753, 8.507059e+37
    %v755 = vand.u32 %v743, 2147483648
    %v756 = vor.u32 1.1754944e-38, %v755
    %v757 = vsel %vm754, %v756, %v752
    %v758 = vmul.f32 1.0, %v757
    %v759 = vadd.f32 %v221, %v736
    %v760 = vxor.u32 %v759, 2147483648
    %v761 = vmul.f32 %v760, 1.442695
    %v762 = vpow.pop %v761
    %v763 = vadd.f32 %v762, 1.0
    %v764 = vrcp.pop %v763
    %v765 = vmul.f32 %v763, %v764
    %v766 = vsub.f32 1.0, %v765
    %v767 = vmul.f32 %v764, %v766
    %v768 = vadd.f32 %v764, %v767
    %vm769 = vweird.f32 %v763
    %vm770 = vweird.f32 %v764
    %vm771 = vmor %vm769, %vm770
    %v772 = vsel %vm771, %v764, %v768
    %v773 = vand.u32 2147483647, %v763
    %vm774 = vcmp.eq.f32.partialorder %v773, 8.507059e+37
    %v775 = vand.u32 %v763, 2147483648
    %v776 = vor.u32 1.1754944e-38, %v775
    %v777 = vsel %vm774, %v776, %v772
    %v778 = vmul.f32 1.0, %v777
    %779 = vmatpush.bf16.msra.mxu0 0
    %780 = vmatpush.bf16.msra.mxu0 0
    %781 = vmatpush.bf16.msra.mxu0 0
    %782 = vmatpush.bf16.msra.mxu0 0
    %783 = vmatpush.bf16.msra.mxu0 0
    %784 = vmatpush.bf16.msra.mxu0 0
    %785 = vmatpush.bf16.msra.mxu0 %v412
    %786 = vmatpush.bf16.msra.mxu0 %v411
    %787 = vmatmul.bf16.gmra.mxu0 %v711
    %v788 = vpop.f32.mrf.mxu0
    %v789 = vadd.f32 %v401, %v788
    %v790 = vpop.f32.mrf.mxu0
    %791 = vdwg.mxu0
    %v792 = vmul.f32 %v758, %v789
    %v793 = vadd.f32 %v280, %v792
    %v794 = vtanh.pop %v793
    %v795 = vsub.f32 1.0, %v778
    %v796 = vmul.f32 %v795, %v794
    %v797 = vmul.f32 %v778, %v708
    %v798 = vadd.f32 %v796, %v797
    %v799 = vsel %vm292, %v798, %v708
    %800 = vst.msk [vmem:[#allocation8] sm:$0xff] %vm318, %v799
    %v801 = vpack.c.bf16 %v799, %v799
    %v802 = vld [vmem:[#allocation2] sm:$0xf]
    %v803 = vld [vmem:[#allocation2 + $0x4] sm:$0xf]
    %v804 = vld [vmem:[#allocation2 + $0x8] sm:$0xf]
    %v805 = vld [vmem:[#allocation2 + $0xc] sm:$0xf]
    %v806 = vld [vmem:[%s14] sm:$0x1]
    %v808 = vperm.slane %v806, 0
    %v814 = vunpack.c.l.b16 %v802
    %v815 = vunpack.c.l.b16 %v803
    %v816 = vunpack.c.l.b16 %v804
    %v817 = vunpack.c.l.b16 %v805
    %v818 = vpack.c.b16 %v815, %v814
    %v819 = vpack.c.b16 %v817, %v816
    %v823 = vsel %vm318, %v801, 0
    %825 = vmatpush.bf16.msra.mxu0 0
    %826 = vmatpush.bf16.msra.mxu0 0
    %827 = vmatpush.bf16.msra.mxu0 0
    %828 = vmatpush.bf16.msra.mxu0 0
    %829 = vmatpush.bf16.msra.mxu0 0
    %830 = vmatpush.bf16.msra.mxu0 0
    %831 = vmatpush.bf16.msra.mxu0 %v819
    %832 = vmatpush.bf16.msra.mxu0 %v818
    %833 = vmatmul.bf16.gmra.mxu0 %v823
    %v834 = vpop.f32.mrf.mxu0
    %v835 = vadd.f32 %v808, %v834
    %v836 = vpop.f32.mrf.mxu0
    %837 = vdwg.mxu0
    %v838 = vmax.f32 %v835, 0.0
    %v839 = vpack.c.bf16 %v838, %v838
    %v840 = vld [vmem:[%s15] sm:$0xf]
    %v841 = vld [vmem:[%s15 + $0x4] sm:$0xf]
    %v842 = vld [vmem:[%s15 + $0x8] sm:$0xf]
    %v843 = vld [vmem:[%s15 + $0xc] sm:$0xf]
    %v844 = vld [vmem:[%s16] sm:$0x1]
    %v846 = vperm.slane %v844, 0
    %v852 = vunpack.c.l.b16 %v840
    %v853 = vunpack.c.l.b16 %v841
    %v854 = vunpack.c.l.b16 %v842
    %v855 = vunpack.c.l.b16 %v843
    %v856 = vpack.c.b16 %v853, %v852
    %v857 = vpack.c.b16 %v855, %v854
    %v861 = vsel %vm318, %v839, 0
    %863 = vmatpush.bf16.msra.mxu0 0
    %864 = vmatpush.bf16.msra.mxu0 0
    %865 = vmatpush.bf16.msra.mxu0 0
    %866 = vmatpush.bf16.msra.mxu0 0
    %867 = vmatpush.bf16.msra.mxu0 0
    %868 = vmatpush.bf16.msra.mxu0 0
    %869 = vmatpush.bf16.msra.mxu0 %v857
    %870 = vmatpush.bf16.msra.mxu0 %v856
    %871 = vmatmul.bf16.gmra.mxu0 %v861
    %v872 = vpop.f32.mrf.mxu0
    %v873 = vadd.f32 %v846, %v872
    %v874 = vpop.f32.mrf.mxu0
    %875 = vdwg.mxu0
    %v876 = vxor.u32 %v873, 2147483648
    %v877 = vmul.f32 %v876, 1.442695
    %v878 = vpow.pop %v877
    %v879 = vadd.f32 %v878, 1.0
    %v880 = vrcp.pop %v879
    %v881 = vmul.f32 %v879, %v880
    %v882 = vsub.f32 1.0, %v881
    %v883 = vmul.f32 %v880, %v882
    %v884 = vadd.f32 %v880, %v883
    %vm885 = vweird.f32 %v879
    %vm886 = vweird.f32 %v880
    %vm887 = vmor %vm885, %vm886
    %v888 = vsel %vm887, %v880, %v884
    %v889 = vand.u32 2147483647, %v879
    %vm890 = vcmp.eq.f32.partialorder %v889, 8.507059e+37
    %v891 = vand.u32 %v879, 2147483648
    %v892 = vor.u32 1.1754944e-38, %v891
    %v893 = vsel %vm890, %v892, %v888
    %v894 = vmul.f32 1.0, %v893
    %vm895 = vcmask 64512
    %896 = vst.msk [vmem:[#allocation6] sm:$0xff] %vm895, %v894
    %v897 = vld [vmem:[%s2] sm:$0xff]
    %v898 = vmax.f32 %v894, 1e-37
    %v899 = vlog2.pop %v898
    %v900 = vmul.f32 %v899, 0.6931472
    %v901 = vmax.f32 %v900, -100.0
    %v902 = vsub.f32 1.0, %v894
    %v903 = vmax.f32 %v902, 1e-37
    %v904 = vlog2.pop %v903
    %v905 = vmul.f32 %v904, 0.6931472
    %v906 = vmax.f32 %v905, -100.0
    %v907 = vmul.f32 %v897, %v901
    %v908 = vsub.f32 1.0, %v897
    %v909 = vmul.f32 %v908, %v906
    %v910 = vadd.f32 %v907, %v909
    %v911 = vsub.f32 0.0, %v910
    %912 = vst.msk [vmem:[#allocation5] sm:$0xff] %vm895, %v911
    // Predicated region
    $region74: #{tpu_custom_call.1} parent=1 // pred_check
      _
    $region75: #{tpu_custom_call.1} parent=1 // pred_check_branch
      %914 = sbr.rel (0) target = $region77
    $region76: #{tpu_custom_call.1} parent=1 // pred_region
      %916 = vsyncadd [#allocation4], 0
      %s918 = sshll.u32 [#allocation5], 4
      %s919 = int_to_ptr.vmem [resolvable:$true] %s918
      %s920 = sshll.u32 %s17, 4
      %s921 = int_to_ptr.hbm [resolvable:$true] %s920
      %923 = dma.vmem_to_hbm [thread:$0]  %s919, 128, %s921, [#allocation4]
    $region77: #{tpu_custom_call.1} parent=1 // pred_fallthru
      _
    // Predicated region
    $region78: #{tpu_custom_call.1} parent=1 // pred_check
      _
    $region79: #{tpu_custom_call.1} parent=1 // pred_check_branch
      %925 = sbr.rel (0) target = $region81
    $region80: #{tpu_custom_call.1} parent=1 // pred_region
      %927 = vsyncadd [#allocation7], 0
      %s929 = sshll.u32 [#allocation6], 4
      %s930 = int_to_ptr.vmem [resolvable:$true] %s929
      %s931 = sshll.u32 %s18, 4
      %s932 = int_to_ptr.hbm [resolvable:$true] %s931
      %934 = dma.vmem_to_hbm [thread:$0]  %s930, 128, %s932, [#allocation7]
    $region81: #{tpu_custom_call.1} parent=1 // pred_fallthru
      _
    // Predicated region
    $region82: #{tpu_custom_call.1} parent=1 // pred_check
      _
    $region83: #{tpu_custom_call.1} parent=1 // pred_check_branch
      %936 = sbr.rel (0) target = $region85
    $region84: #{tpu_custom_call.1} parent=1 // pred_region
      %938 = vsyncadd [#allocation7], 0
      %s940 = sshll.u32 [#allocation8], 4
      %s941 = int_to_ptr.vmem [resolvable:$true] %s940
      %s942 = sshll.u32 %s19, 4
      %s943 = int_to_ptr.hbm [resolvable:$true] %s942
      %945 = dma.vmem_to_hbm [thread:$0]  %s941, 128, %s943, [#allocation7]
    $region85: #{tpu_custom_call.1} parent=1 // pred_fallthru
      _
    // Predicated region
    $region86: #{tpu_custom_call.1} parent=1 // pred_check
      _
    $region87: #{tpu_custom_call.1} parent=1 // pred_check_branch
      %947 = sbr.rel (0) target = $region89
    $region88: #{tpu_custom_call.1} parent=1 // pred_region
      %949 = dma.done [#allocation4], 128
    $region89: #{tpu_custom_call.1} parent=1 // pred_fallthru
      _
    // Predicated region
    $region90: #{tpu_custom_call.1} parent=1 // pred_check
      _
    $region91: #{tpu_custom_call.1} parent=1 // pred_check_branch
      %951 = sbr.rel (0) target = $region93
    $region92: #{tpu_custom_call.1} parent=1 // pred_region
      %953 = dma.done [#allocation7], 128
    $region93: #{tpu_custom_call.1} parent=1 // pred_fallthru
      _
    // Predicated region
    $region94: #{tpu_custom_call.1} parent=1 // pred_check
      _
    $region95: #{tpu_custom_call.1} parent=1 // pred_check_branch
      %955 = sbr.rel (0) target = $region97
    $region96: #{tpu_custom_call.1} parent=1 // pred_region
      %957 = dma.done [#allocation7], 128
    $region97: #{tpu_custom_call.1} parent=1 // pred_fallthru
      _
    %958 = vsyncpa [#allocation3], 1
    %959 = vsyncpa [#allocation4], 1
    %960 = vsyncpa [#allocation7], 1

</llo_original>
